<compile_context>
chip_gen: v6e
topology: v6e:2x2x1
jax: 0.10.0
libtpu: 0.0.40
codegen_flags: <defaults>
</compile_context>

<pallas_src>
import jax
import jax.numpy as jnp
from jax.experimental import pallas as pl
from jax.experimental.pallas import tpu as pltpu
import numpy as np


def _round_up(x, m):
    return ((x + m - 1) // m) * m


def gru_forward(x, h0, w_ih, w_hh, b_ih, b_hh, n_layers):
    """x: (B, input_size, T) as in the PyTorch module. Returns (n_layers, B, H)."""
    B, D, T = x.shape
    H = h0.shape[1]
    assert n_layers <= T, "forward() indexes input[i] for i < n_layers"

    f32, bf16 = jnp.float32, jnp.bfloat16
    Tn = n_layers
    Bp = _round_up(B, 16)          # bf16 sublane tile is (16, 128)
    Dp = _round_up(D, 128)         # MXU K dim of the hoisted input projection
    Gp = _round_up(3 * H, 128)     # single packed gate slab (lane-dense)

    # Packed gate layout inside one Gp-lane slab (H < 128 case):
    #   [ r : 0..H | z : H..2H | n : Gp/2..Gp/2+H | z duplicate : Gp-H..Gp ]
    # Rolls by Gp/2 and Gp-H bring the n-parts and z to lanes [0:H]; with z duplicated
    # both rotation directions pick up identical (correct) data, and the roll by Gp/2
    # is inherently direction-agnostic.  Everything stays full 128-lane width.
    assert 4 * H <= Gp, ("packed-gate path needs 4*H <= round_up(3H,128); "
                         "use per-gate 128-lane slabs for larger H")
    off_r, off_z, off_n, off_zdup = 0, H, Gp // 2, Gp - H
    shift_n = Gp // 2      # n slab   -> lanes [0:H]
    shift_z = Gp - H       # z (or duplicate) -> lanes [0:H]

    # --- wrapper-side layout plumbing (plain JAX) ----------------------------------
    x_tm = jnp.transpose(x, (2, 0, 1))[:Tn]                                 # (Tn, B, D)
    x_p = jnp.zeros((Tn, Bp, Dp), bf16).at[:, :B, :D].set(x_tm.astype(bf16))
    x2d = x_p.reshape(Tn * Bp, Dp)                                          # (Tn*Bp, Dp)

    h0_p = jnp.zeros((Bp, Gp), f32).at[:B, :H].set(h0.astype(f32))

    wihT = w_ih.T.astype(f32)                                               # (D, 3H)
    whhT = w_hh.T.astype(f32)                                               # (H, 3H)
    wih_p = jnp.zeros((Dp, Gp), f32)
    whh_p = jnp.zeros((Gp, Gp), f32)
    for off, g in ((off_r, 0), (off_z, 1), (off_n, 2), (off_zdup, 1)):
        wih_p = wih_p.at[:D, off:off + H].set(wihT[:, g * H:(g + 1) * H])
        whh_p = whh_p.at[:H, off:off + H].set(whhT[:, g * H:(g + 1) * H])
    wih_p = wih_p.astype(bf16)         # bf16 MXU operands, f32 accumulation
    whh_p = whh_p.astype(bf16)

    b_ih = b_ih.astype(f32)
    b_hh = b_hh.astype(f32)
    brz_p = jnp.zeros((1, Gp), f32)
    brz_p = brz_p.at[0, off_r:off_r + H].set(b_ih[0:H] + b_hh[0:H])
    brz_p = brz_p.at[0, off_z:off_z + H].set(b_ih[H:2 * H] + b_hh[H:2 * H])
    brz_p = brz_p.at[0, off_zdup:off_zdup + H].set(b_ih[H:2 * H] + b_hh[H:2 * H])
    bin_p = jnp.zeros((1, Gp), f32).at[0, :H].set(b_ih[2 * H:3 * H])
    bhn_p = jnp.zeros((1, Gp), f32).at[0, :H].set(b_hh[2 * H:3 * H])

    def gru_kernel(x_ref, h0_ref, wih_ref, whh_ref, brz_ref, bin_ref, bhn_ref,
                   out_ref, gi_scr):
        Tn_, Bp_, Gp_ = out_ref.shape

        # Prologue: hoisted non-recurrent projection for ALL steps — one bf16 MXU
        # matmul, f32 accumulate, written to a VMEM scratch (biases NOT materialized).
        gi_scr[...] = jnp.dot(x_ref[...], wih_ref[...],
                              preferred_element_type=jnp.float32)

        # Loop-invariant bias broadcasts hoisted out of the recurrence.
        b_rz = jnp.broadcast_to(brz_ref[...], (Bp_, Gp_))
        b_in = jnp.broadcast_to(bin_ref[...], (Bp_, Gp_))
        b_hn = jnp.broadcast_to(bhn_ref[...], (Bp_, Gp_))

        h0v = h0_ref[...].astype(jnp.float32)

        def step(t, h):
            start = t * Bp_
            if not isinstance(t, int):
                start = pl.multiple_of(start, Bp_)
            gi = gi_scr[pl.ds(start, Bp_), :]                      # (Bp, Gp) f32
            # Recurrent matmul: re-read the small bf16 weight from VMEM each step
            # rather than pinning it in vregs across the whole unrolled loop.
            gh = jnp.dot(h.astype(jnp.bfloat16), whh_ref[...],
                         preferred_element_type=jnp.float32)       # (Bp, Gp) f32
            s = jax.nn.sigmoid(gi + gh + b_rz)      # r at [0:H]; z at [H:2H] & [Gp-H:Gp]
            z = pltpu.roll(s, shift_z, axis=1)      # z    -> lanes [0:H]
            gin = pltpu.roll(gi, shift_n, axis=1)   # gi_n -> lanes [0:H]
            ghn = pltpu.roll(gh, shift_n, axis=1)   # gh_n -> lanes [0:H]
            n = jnp.tanh(gin + b_in + s * (ghn + b_hn))   # valid in lanes [0:H]
            h_new = (1.0 - z) * n + z * h                 # lanes >= H: bounded junk
            out_ref[t] = h_new.astype(out_ref.dtype)
            return h_new

        if Tn_ <= 8:
            # Tiny static trip count: full unroll.
            h = h0v
            for t in range(Tn_):
                h = step(t, h)
        else:
            # Larger T: bounded live ranges, steady-state body for the scheduler.
            jax.lax.fori_loop(0, Tn_, step, h0v, unroll=2)

    out_p = pl.pallas_call(
        gru_kernel,
        out_shape=jax.ShapeDtypeStruct((Tn, Bp, Gp), jnp.float32),
        in_specs=[pl.BlockSpec(memory_space=pltpu.MemorySpace.VMEM)] * 7,
        out_specs=pl.BlockSpec(memory_space=pltpu.MemorySpace.VMEM),
        scratch_shapes=[pltpu.VMEM((Tn * Bp, Gp), jnp.float32)],
        compiler_params=pltpu.CompilerParams(vmem_limit_bytes=32 * 1024 * 1024),
    )(x2d, h0_p, wih_p, whh_p, brz_p, bin_p, bhn_p)

    # Slice padding (batch rows, gate/padding lanes) back off.
    return out_p[:, :B, :H]


def gru_reference(x, h0, w_ih, w_hh, b_ih, b_hh, n_layers):
    """Pure-JAX f32 reference matching torch.nn.GRUCell semantics."""
    H = h0.shape[1]
    x_tm = jnp.transpose(x, (2, 0, 1))[:n_layers].astype(jnp.float32)
    h = h0.astype(jnp.float32)
    outs = []
    for t in range(n_layers):
        gi = x_tm[t] @ w_ih.T + b_ih
        gh = h @ w_hh.T + b_hh
        i_r, i_z, i_n = gi[:, :H], gi[:, H:2 * H], gi[:, 2 * H:]
        h_r, h_z, h_n = gh[:, :H], gh[:, H:2 * H], gh[:, 2 * H:]
        r = jax.nn.sigmoid(i_r + h_r)
        z = jax.nn.sigmoid(i_z + h_z)
        n = jnp.tanh(i_n + r * h_n)
        h = (1.0 - z) * n + z * h
        outs.append(h)
    return jnp.stack(outs, axis=0)


if __name__ == "__main__":
    # Small shapes consistent with the module's forward.
    B = 4            # batch
    D = 16           # input_size
    H = 32           # hidden_size
    T = 8            # sequence length (input dim 2)
    N_LAYERS = 8     # number of recurrent steps taken by forward()

    key = jax.random.PRNGKey(0)
    k_x, k_wih, k_whh, k_bih, k_bhh = jax.random.split(key, 5)

    # PyTorch GRUCell default init: U(-1/sqrt(H), 1/sqrt(H)).
    bound = 1.0 / np.sqrt(H)
    x = jax.random.normal(k_x, (B, D, T), dtype=jnp.float32)
    h0 = jnp.zeros((B, H), dtype=jnp.float32)
    w_ih = jax.random.uniform(k_wih, (3 * H, D), minval=-bound, maxval=bound, dtype=jnp.float32)
    w_hh = jax.random.uniform(k_whh, (3 * H, H), minval=-bound, maxval=bound, dtype=jnp.float32)
    b_ih = jax.random.uniform(k_bih, (3 * H,), minval=-bound, maxval=bound, dtype=jnp.float32)
    b_hh = jax.random.uniform(k_bhh, (3 * H,), minval=-bound, maxval=bound, dtype=jnp.float32)

    out = gru_forward(x, h0, w_ih, w_hh, b_ih, b_hh, N_LAYERS)
    out = jax.block_until_ready(out)

    ref = gru_reference(x, h0, w_ih, w_hh, b_ih, b_hh, N_LAYERS)
    # Tolerance loosened vs a pure-f32 kernel: the matmul operands are bf16
    # (accumulation and the recurrent carry stay f32).
    np.testing.assert_allclose(np.asarray(out), np.asarray(ref), rtol=2e-2, atol=2e-2)

    print("KERNEL_OK")
</pallas_src>

<mosaic_0001>
module attributes {stable_mosaic.version = 11 : i64} {
  func.func @gru_kernel(%arg0: memref<128x128xbf16, #tpu.memory_space<vmem>>, %arg1: memref<16x128xf32, #tpu.memory_space<vmem>>, %arg2: memref<128x128xbf16, #tpu.memory_space<vmem>>, %arg3: memref<128x128xbf16, #tpu.memory_space<vmem>>, %arg4: memref<1x128xf32, #tpu.memory_space<vmem>>, %arg5: memref<1x128xf32, #tpu.memory_space<vmem>>, %arg6: memref<1x128xf32, #tpu.memory_space<vmem>>, %arg7: memref<8x16x128xf32, #tpu.memory_space<vmem>>, %arg8: memref<128x128xf32, #tpu.memory_space<vmem>>) attributes {dimension_semantics = [], scalar_prefetch = 0 : i64, scratch_operands = 1 : i64, tpu.core_type = #tpu.core_type<tc>} {
    %c0 = arith.constant 0 : index
    %c0_0 = arith.constant 0 : index
    %0 = vector.load %arg0[%c0, %c0_0] : memref<128x128xbf16, #tpu.memory_space<vmem>>, vector<128x128xbf16>
    %c0_1 = arith.constant 0 : index
    %c0_2 = arith.constant 0 : index
    %1 = vector.load %arg2[%c0_1, %c0_2] : memref<128x128xbf16, #tpu.memory_space<vmem>>, vector<128x128xbf16>
    %cst = arith.constant dense<0.000000e+00> : vector<128x128xf32>
    %2 = tpu.matmul %0, %1, %cst {dimension_numbers = #tpu.dot_dimension_numbers<[1], [0], [0], [1], [0, 0, 1, 1], [], []>} : vector<128x128xbf16>, vector<128x128xbf16>, vector<128x128xf32> -> vector<128x128xf32>
    %c0_3 = arith.constant 0 : index
    %c0_4 = arith.constant 0 : index
    %3 = vector.load %arg8[%c0_3, %c0_4] : memref<128x128xf32, #tpu.memory_space<vmem>>, vector<128x128xf32>
    tpu.vector_store %arg8[%c0_3, %c0_4], %2 {strides = array<i32>} : memref<128x128xf32, #tpu.memory_space<vmem>>, vector<128x128xf32>,
    %c0_5 = arith.constant 0 : index
    %c0_6 = arith.constant 0 : index
    %4 = vector.load %arg4[%c0_5, %c0_6] : memref<1x128xf32, #tpu.memory_space<vmem>>, vector<1x128xf32>
    %5 = vector.shape_cast %4 : vector<1x128xf32> to vector<1x128xf32>
    %6 = vector.broadcast %5 : vector<1x128xf32> to vector<16x128xf32>
    %c0_7 = arith.constant 0 : index
    %c0_8 = arith.constant 0 : index
    %7 = vector.load %arg5[%c0_7, %c0_8] : memref<1x128xf32, #tpu.memory_space<vmem>>, vector<1x128xf32>
    %8 = vector.shape_cast %7 : vector<1x128xf32> to vector<1x128xf32>
    %9 = vector.broadcast %8 : vector<1x128xf32> to vector<16x128xf32>
    %c0_9 = arith.constant 0 : index
    %c0_10 = arith.constant 0 : index
    %10 = vector.load %arg6[%c0_9, %c0_10] : memref<1x128xf32, #tpu.memory_space<vmem>>, vector<1x128xf32>
    %11 = vector.shape_cast %10 : vector<1x128xf32> to vector<1x128xf32>
    %12 = vector.broadcast %11 : vector<1x128xf32> to vector<16x128xf32>
    %c0_11 = arith.constant 0 : index
    %c0_12 = arith.constant 0 : index
    %13 = vector.load %arg1[%c0_11, %c0_12] : memref<16x128xf32, #tpu.memory_space<vmem>>, vector<16x128xf32>
    %c0_13 = arith.constant 0 : index
    %c0_14 = arith.constant 0 : index
    %14 = vector.load %arg8[%c0_13, %c0_14] : memref<128x128xf32, #tpu.memory_space<vmem>>, vector<16x128xf32>
    %15 = arith.truncf %13 : vector<16x128xf32> to vector<16x128xbf16>
    %c0_15 = arith.constant 0 : index
    %c0_16 = arith.constant 0 : index
    %16 = vector.load %arg3[%c0_15, %c0_16] : memref<128x128xbf16, #tpu.memory_space<vmem>>, vector<128x128xbf16>
    %cst_17 = arith.constant dense<0.000000e+00> : vector<16x128xf32>
    %17 = tpu.matmul %15, %16, %cst_17 {dimension_numbers = #tpu.dot_dimension_numbers<[1], [0], [0], [1], [0, 0, 1, 1], [], []>} : vector<16x128xbf16>, vector<128x128xbf16>, vector<16x128xf32> -> vector<16x128xf32>
    %18 = arith.addf %14, %17 : vector<16x128xf32>
    %19 = arith.addf %18, %6 : vector<16x128xf32>
    %20 = arith.negf %19 : vector<16x128xf32>
    %21 = math.exp %20 : vector<16x128xf32>
    %cst_18 = arith.constant 1.000000e+00 : f32
    %22 = vector.broadcast %cst_18 : f32 to vector<16x128xf32>
    %23 = arith.addf %22, %21 : vector<16x128xf32>
    %24 = arith.divf %22, %23 : vector<16x128xf32>
    %c96_i32 = arith.constant 96 : i32
    %25 = tpu.dynamic_rotate %24 by %c96_i32 dim 1 : vector<16x128xf32>, i32 -> vector<16x128xf32>
    %c64_i32 = arith.constant 64 : i32
    %26 = tpu.dynamic_rotate %14 by %c64_i32 dim 1 : vector<16x128xf32>, i32 -> vector<16x128xf32>
    %c64_i32_19 = arith.constant 64 : i32
    %27 = tpu.dynamic_rotate %17 by %c64_i32_19 dim 1 : vector<16x128xf32>, i32 -> vector<16x128xf32>
    %28 = arith.addf %26, %9 : vector<16x128xf32>
    %29 = arith.addf %27, %12 : vector<16x128xf32>
    %30 = arith.mulf %24, %29 : vector<16x128xf32>
    %31 = arith.addf %28, %30 : vector<16x128xf32>
    %32 = math.tanh %31 : vector<16x128xf32>
    %cst_20 = arith.constant 1.000000e+00 : f32
    %33 = vector.broadcast %cst_20 : f32 to vector<16x128xf32>
    %34 = arith.subf %33, %25 : vector<16x128xf32>
    %35 = arith.mulf %34, %32 : vector<16x128xf32>
    %36 = arith.mulf %25, %13 : vector<16x128xf32>
    %37 = arith.addf %35, %36 : vector<16x128xf32>
    %c0_21 = arith.constant 0 : index
    %c0_22 = arith.constant 0 : index
    %c0_23 = arith.constant 0 : index
    %38 = vector.load %arg7[%c0_21, %c0_22, %c0_23] : memref<8x16x128xf32, #tpu.memory_space<vmem>>, vector<1x16x128xf32>
    %39 = vector.shape_cast %38 : vector<1x16x128xf32> to vector<16x128xf32>
    %40 = vector.shape_cast %37 : vector<16x128xf32> to vector<1x16x128xf32>
    tpu.vector_store %arg7[%c0_21, %c0_22, %c0_23], %40 {strides = array<i32>} : memref<8x16x128xf32, #tpu.memory_space<vmem>>, vector<1x16x128xf32>,
    %c16 = arith.constant 16 : index
    %c0_24 = arith.constant 0 : index
    %41 = vector.load %arg8[%c16, %c0_24] : memref<128x128xf32, #tpu.memory_space<vmem>>, vector<16x128xf32>
    %42 = arith.truncf %37 : vector<16x128xf32> to vector<16x128xbf16>
    %c0_25 = arith.constant 0 : index
    %c0_26 = arith.constant 0 : index
    %43 = vector.load %arg3[%c0_25, %c0_26] : memref<128x128xbf16, #tpu.memory_space<vmem>>, vector<128x128xbf16>
    %cst_27 = arith.constant dense<0.000000e+00> : vector<16x128xf32>
    %44 = tpu.matmul %42, %43, %cst_27 {dimension_numbers = #tpu.dot_dimension_numbers<[1], [0], [0], [1], [0, 0, 1, 1], [], []>} : vector<16x128xbf16>, vector<128x128xbf16>, vector<16x128xf32> -> vector<16x128xf32>
    %45 = arith.addf %41, %44 : vector<16x128xf32>
    %46 = arith.addf %45, %6 : vector<16x128xf32>
    %47 = arith.negf %46 : vector<16x128xf32>
    %48 = math.exp %47 : vector<16x128xf32>
    %cst_28 = arith.constant 1.000000e+00 : f32
    %49 = vector.broadcast %cst_28 : f32 to vector<16x128xf32>
    %50 = arith.addf %49, %48 : vector<16x128xf32>
    %51 = arith.divf %49, %50 : vector<16x128xf32>
    %c96_i32_29 = arith.constant 96 : i32
    %52 = tpu.dynamic_rotate %51 by %c96_i32_29 dim 1 : vector<16x128xf32>, i32 -> vector<16x128xf32>
    %c64_i32_30 = arith.constant 64 : i32
    %53 = tpu.dynamic_rotate %41 by %c64_i32_30 dim 1 : vector<16x128xf32>, i32 -> vector<16x128xf32>
    %c64_i32_31 = arith.constant 64 : i32
    %54 = tpu.dynamic_rotate %44 by %c64_i32_31 dim 1 : vector<16x128xf32>, i32 -> vector<16x128xf32>
    %55 = arith.addf %53, %9 : vector<16x128xf32>
    %56 = arith.addf %54, %12 : vector<16x128xf32>
    %57 = arith.mulf %51, %56 : vector<16x128xf32>
    %58 = arith.addf %55, %57 : vector<16x128xf32>
    %59 = math.tanh %58 : vector<16x128xf32>
    %cst_32 = arith.constant 1.000000e+00 : f32
    %60 = vector.broadcast %cst_32 : f32 to vector<16x128xf32>
    %61 = arith.subf %60, %52 : vector<16x128xf32>
    %62 = arith.mulf %61, %59 : vector<16x128xf32>
    %63 = arith.mulf %52, %37 : vector<16x128xf32>
    %64 = arith.addf %62, %63 : vector<16x128xf32>
    %c1 = arith.constant 1 : index
    %c0_33 = arith.constant 0 : index
    %c0_34 = arith.constant 0 : index
    %65 = vector.load %arg7[%c1, %c0_33, %c0_34] : memref<8x16x128xf32, #tpu.memory_space<vmem>>, vector<1x16x128xf32>
    %66 = vector.shape_cast %65 : vector<1x16x128xf32> to vector<16x128xf32>
    %67 = vector.shape_cast %64 : vector<16x128xf32> to vector<1x16x128xf32>
    tpu.vector_store %arg7[%c1, %c0_33, %c0_34], %67 {strides = array<i32>} : memref<8x16x128xf32, #tpu.memory_space<vmem>>, vector<1x16x128xf32>,
    %c32 = arith.constant 32 : index
    %c0_35 = arith.constant 0 : index
    %68 = vector.load %arg8[%c32, %c0_35] : memref<128x128xf32, #tpu.memory_space<vmem>>, vector<16x128xf32>
    %69 = arith.truncf %64 : vector<16x128xf32> to vector<16x128xbf16>
    %c0_36 = arith.constant 0 : index
    %c0_37 = arith.constant 0 : index
    %70 = vector.load %arg3[%c0_36, %c0_37] : memref<128x128xbf16, #tpu.memory_space<vmem>>, vector<128x128xbf16>
    %cst_38 = arith.constant dense<0.000000e+00> : vector<16x128xf32>
    %71 = tpu.matmul %69, %70, %cst_38 {dimension_numbers = #tpu.dot_dimension_numbers<[1], [0], [0], [1], [0, 0, 1, 1], [], []>} : vector<16x128xbf16>, vector<128x128xbf16>, vector<16x128xf32> -> vector<16x128xf32>
    %72 = arith.addf %68, %71 : vector<16x128xf32>
    %73 = arith.addf %72, %6 : vector<16x128xf32>
    %74 = arith.negf %73 : vector<16x128xf32>
    %75 = math.exp %74 : vector<16x128xf32>
    %cst_39 = arith.constant 1.000000e+00 : f32
    %76 = vector.broadcast %cst_39 : f32 to vector<16x128xf32>
    %77 = arith.addf %76, %75 : vector<16x128xf32>
    %78 = arith.divf %76, %77 : vector<16x128xf32>
    %c96_i32_40 = arith.constant 96 : i32
    %79 = tpu.dynamic_rotate %78 by %c96_i32_40 dim 1 : vector<16x128xf32>, i32 -> vector<16x128xf32>
    %c64_i32_41 = arith.constant 64 : i32
    %80 = tpu.dynamic_rotate %68 by %c64_i32_41 dim 1 : vector<16x128xf32>, i32 -> vector<16x128xf32>
    %c64_i32_42 = arith.constant 64 : i32
    %81 = tpu.dynamic_rotate %71 by %c64_i32_42 dim 1 : vector<16x128xf32>, i32 -> vector<16x128xf32>
    %82 = arith.addf %80, %9 : vector<16x128xf32>
    %83 = arith.addf %81, %12 : vector<16x128xf32>
    %84 = arith.mulf %78, %83 : vector<16x128xf32>
    %85 = arith.addf %82, %84 : vector<16x128xf32>
    %86 = math.tanh %85 : vector<16x128xf32>
    %cst_43 = arith.constant 1.000000e+00 : f32
    %87 = vector.broadcast %cst_43 : f32 to vector<16x128xf32>
    %88 = arith.subf %87, %79 : vector<16x128xf32>
    %89 = arith.mulf %88, %86 : vector<16x128xf32>
    %90 = arith.mulf %79, %64 : vector<16x128xf32>
    %91 = arith.addf %89, %90 : vector<16x128xf32>
    %c2 = arith.constant 2 : index
    %c0_44 = arith.constant 0 : index
    %c0_45 = arith.constant 0 : index
    %92 = vector.load %arg7[%c2, %c0_44, %c0_45] : memref<8x16x128xf32, #tpu.memory_space<vmem>>, vector<1x16x128xf32>
    %93 = vector.shape_cast %92 : vector<1x16x128xf32> to vector<16x128xf32>
    %94 = vector.shape_cast %91 : vector<16x128xf32> to vector<1x16x128xf32>
    tpu.vector_store %arg7[%c2, %c0_44, %c0_45], %94 {strides = array<i32>} : memref<8x16x128xf32, #tpu.memory_space<vmem>>, vector<1x16x128xf32>,
    %c48 = arith.constant 48 : index
    %c0_46 = arith.constant 0 : index
    %95 = vector.load %arg8[%c48, %c0_46] : memref<128x128xf32, #tpu.memory_space<vmem>>, vector<16x128xf32>
    %96 = arith.truncf %91 : vector<16x128xf32> to vector<16x128xbf16>
    %c0_47 = arith.constant 0 : index
    %c0_48 = arith.constant 0 : index
    %97 = vector.load %arg3[%c0_47, %c0_48] : memref<128x128xbf16, #tpu.memory_space<vmem>>, vector<128x128xbf16>
    %cst_49 = arith.constant dense<0.000000e+00> : vector<16x128xf32>
    %98 = tpu.matmul %96, %97, %cst_49 {dimension_numbers = #tpu.dot_dimension_numbers<[1], [0], [0], [1], [0, 0, 1, 1], [], []>} : vector<16x128xbf16>, vector<128x128xbf16>, vector<16x128xf32> -> vector<16x128xf32>
    %99 = arith.addf %95, %98 : vector<16x128xf32>
    %100 = arith.addf %99, %6 : vector<16x128xf32>
    %101 = arith.negf %100 : vector<16x128xf32>
    %102 = math.exp %101 : vector<16x128xf32>
    %cst_50 = arith.constant 1.000000e+00 : f32
    %103 = vector.broadcast %cst_50 : f32 to vector<16x128xf32>
    %104 = arith.addf %103, %102 : vector<16x128xf32>
    %105 = arith.divf %103, %104 : vector<16x128xf32>
    %c96_i32_51 = arith.constant 96 : i32
    %106 = tpu.dynamic_rotate %105 by %c96_i32_51 dim 1 : vector<16x128xf32>, i32 -> vector<16x128xf32>
    %c64_i32_52 = arith.constant 64 : i32
    %107 = tpu.dynamic_rotate %95 by %c64_i32_52 dim 1 : vector<16x128xf32>, i32 -> vector<16x128xf32>
    %c64_i32_53 = arith.constant 64 : i32
    %108 = tpu.dynamic_rotate %98 by %c64_i32_53 dim 1 : vector<16x128xf32>, i32 -> vector<16x128xf32>
    %109 = arith.addf %107, %9 : vector<16x128xf32>
    %110 = arith.addf %108, %12 : vector<16x128xf32>
    %111 = arith.mulf %105, %110 : vector<16x128xf32>
    %112 = arith.addf %109, %111 : vector<16x128xf32>
    %113 = math.tanh %112 : vector<16x128xf32>
    %cst_54 = arith.constant 1.000000e+00 : f32
    %114 = vector.broadcast %cst_54 : f32 to vector<16x128xf32>
    %115 = arith.subf %114, %106 : vector<16x128xf32>
    %116 = arith.mulf %115, %113 : vector<16x128xf32>
    %117 = arith.mulf %106, %91 : vector<16x128xf32>
    %118 = arith.addf %116, %117 : vector<16x128xf32>
    %c3 = arith.constant 3 : index
    %c0_55 = arith.constant 0 : index
    %c0_56 = arith.constant 0 : index
    %119 = vector.load %arg7[%c3, %c0_55, %c0_56] : memref<8x16x128xf32, #tpu.memory_space<vmem>>, vector<1x16x128xf32>
    %120 = vector.shape_cast %119 : vector<1x16x128xf32> to vector<16x128xf32>
    %121 = vector.shape_cast %118 : vector<16x128xf32> to vector<1x16x128xf32>
    tpu.vector_store %arg7[%c3, %c0_55, %c0_56], %121 {strides = array<i32>} : memref<8x16x128xf32, #tpu.memory_space<vmem>>, vector<1x16x128xf32>,
    %c64 = arith.constant 64 : index
    %c0_57 = arith.constant 0 : index
    %122 = vector.load %arg8[%c64, %c0_57] : memref<128x128xf32, #tpu.memory_space<vmem>>, vector<16x128xf32>
    %123 = arith.truncf %118 : vector<16x128xf32> to vector<16x128xbf16>
    %c0_58 = arith.constant 0 : index
    %c0_59 = arith.constant 0 : index
    %124 = vector.load %arg3[%c0_58, %c0_59] : memref<128x128xbf16, #tpu.memory_space<vmem>>, vector<128x128xbf16>
    %cst_60 = arith.constant dense<0.000000e+00> : vector<16x128xf32>
    %125 = tpu.matmul %123, %124, %cst_60 {dimension_numbers = #tpu.dot_dimension_numbers<[1], [0], [0], [1], [0, 0, 1, 1], [], []>} : vector<16x128xbf16>, vector<128x128xbf16>, vector<16x128xf32> -> vector<16x128xf32>
    %126 = arith.addf %122, %125 : vector<16x128xf32>
    %127 = arith.addf %126, %6 : vector<16x128xf32>
    %128 = arith.negf %127 : vector<16x128xf32>
    %129 = math.exp %128 : vector<16x128xf32>
    %cst_61 = arith.constant 1.000000e+00 : f32
    %130 = vector.broadcast %cst_61 : f32 to vector<16x128xf32>
    %131 = arith.addf %130, %129 : vector<16x128xf32>
    %132 = arith.divf %130, %131 : vector<16x128xf32>
    %c96_i32_62 = arith.constant 96 : i32
    %133 = tpu.dynamic_rotate %132 by %c96_i32_62 dim 1 : vector<16x128xf32>, i32 -> vector<16x128xf32>
    %c64_i32_63 = arith.constant 64 : i32
    %134 = tpu.dynamic_rotate %122 by %c64_i32_63 dim 1 : vector<16x128xf32>, i32 -> vector<16x128xf32>
    %c64_i32_64 = arith.constant 64 : i32
    %135 = tpu.dynamic_rotate %125 by %c64_i32_64 dim 1 : vector<16x128xf32>, i32 -> vector<16x128xf32>
    %136 = arith.addf %134, %9 : vector<16x128xf32>
    %137 = arith.addf %135, %12 : vector<16x128xf32>
    %138 = arith.mulf %132, %137 : vector<16x128xf32>
    %139 = arith.addf %136, %138 : vector<16x128xf32>
    %140 = math.tanh %139 : vector<16x128xf32>
    %cst_65 = arith.constant 1.000000e+00 : f32
    %141 = vector.broadcast %cst_65 : f32 to vector<16x128xf32>
    %142 = arith.subf %141, %133 : vector<16x128xf32>
    %143 = arith.mulf %142, %140 : vector<16x128xf32>
    %144 = arith.mulf %133, %118 : vector<16x128xf32>
    %145 = arith.addf %143, %144 : vector<16x128xf32>
    %c4 = arith.constant 4 : index
    %c0_66 = arith.constant 0 : index
    %c0_67 = arith.constant 0 : index
    %146 = vector.load %arg7[%c4, %c0_66, %c0_67] : memref<8x16x128xf32, #tpu.memory_space<vmem>>, vector<1x16x128xf32>
    %147 = vector.shape_cast %146 : vector<1x16x128xf32> to vector<16x128xf32>
    %148 = vector.shape_cast %145 : vector<16x128xf32> to vector<1x16x128xf32>
    tpu.vector_store %arg7[%c4, %c0_66, %c0_67], %148 {strides = array<i32>} : memref<8x16x128xf32, #tpu.memory_space<vmem>>, vector<1x16x128xf32>,
    %c80 = arith.constant 80 : index
    %c0_68 = arith.constant 0 : index
    %149 = vector.load %arg8[%c80, %c0_68] : memref<128x128xf32, #tpu.memory_space<vmem>>, vector<16x128xf32>
    %150 = arith.truncf %145 : vector<16x128xf32> to vector<16x128xbf16>
    %c0_69 = arith.constant 0 : index
    %c0_70 = arith.constant 0 : index
    %151 = vector.load %arg3[%c0_69, %c0_70] : memref<128x128xbf16, #tpu.memory_space<vmem>>, vector<128x128xbf16>
    %cst_71 = arith.constant dense<0.000000e+00> : vector<16x128xf32>
    %152 = tpu.matmul %150, %151, %cst_71 {dimension_numbers = #tpu.dot_dimension_numbers<[1], [0], [0], [1], [0, 0, 1, 1], [], []>} : vector<16x128xbf16>, vector<128x128xbf16>, vector<16x128xf32> -> vector<16x128xf32>
    %153 = arith.addf %149, %152 : vector<16x128xf32>
    %154 = arith.addf %153, %6 : vector<16x128xf32>
    %155 = arith.negf %154 : vector<16x128xf32>
    %156 = math.exp %155 : vector<16x128xf32>
    %cst_72 = arith.constant 1.000000e+00 : f32
    %157 = vector.broadcast %cst_72 : f32 to vector<16x128xf32>
    %158 = arith.addf %157, %156 : vector<16x128xf32>
    %159 = arith.divf %157, %158 : vector<16x128xf32>
    %c96_i32_73 = arith.constant 96 : i32
    %160 = tpu.dynamic_rotate %159 by %c96_i32_73 dim 1 : vector<16x128xf32>, i32 -> vector<16x128xf32>
    %c64_i32_74 = arith.constant 64 : i32
    %161 = tpu.dynamic_rotate %149 by %c64_i32_74 dim 1 : vector<16x128xf32>, i32 -> vector<16x128xf32>
    %c64_i32_75 = arith.constant 64 : i32
    %162 = tpu.dynamic_rotate %152 by %c64_i32_75 dim 1 : vector<16x128xf32>, i32 -> vector<16x128xf32>
    %163 = arith.addf %161, %9 : vector<16x128xf32>
    %164 = arith.addf %162, %12 : vector<16x128xf32>
    %165 = arith.mulf %159, %164 : vector<16x128xf32>
    %166 = arith.addf %163, %165 : vector<16x128xf32>
    %167 = math.tanh %166 : vector<16x128xf32>
    %cst_76 = arith.constant 1.000000e+00 : f32
    %168 = vector.broadcast %cst_76 : f32 to vector<16x128xf32>
    %169 = arith.subf %168, %160 : vector<16x128xf32>
    %170 = arith.mulf %169, %167 : vector<16x128xf32>
    %171 = arith.mulf %160, %145 : vector<16x128xf32>
    %172 = arith.addf %170, %171 : vector<16x128xf32>
    %c5 = arith.constant 5 : index
    %c0_77 = arith.constant 0 : index
    %c0_78 = arith.constant 0 : index
    %173 = vector.load %arg7[%c5, %c0_77, %c0_78] : memref<8x16x128xf32, #tpu.memory_space<vmem>>, vector<1x16x128xf32>
    %174 = vector.shape_cast %173 : vector<1x16x128xf32> to vector<16x128xf32>
    %175 = vector.shape_cast %172 : vector<16x128xf32> to vector<1x16x128xf32>
    tpu.vector_store %arg7[%c5, %c0_77, %c0_78], %175 {strides = array<i32>} : memref<8x16x128xf32, #tpu.memory_space<vmem>>, vector<1x16x128xf32>,
    %c96 = arith.constant 96 : index
    %c0_79 = arith.constant 0 : index
    %176 = vector.load %arg8[%c96, %c0_79] : memref<128x128xf32, #tpu.memory_space<vmem>>, vector<16x128xf32>
    %177 = arith.truncf %172 : vector<16x128xf32> to vector<16x128xbf16>
    %c0_80 = arith.constant 0 : index
    %c0_81 = arith.constant 0 : index
    %178 = vector.load %arg3[%c0_80, %c0_81] : memref<128x128xbf16, #tpu.memory_space<vmem>>, vector<128x128xbf16>
    %cst_82 = arith.constant dense<0.000000e+00> : vector<16x128xf32>
    %179 = tpu.matmul %177, %178, %cst_82 {dimension_numbers = #tpu.dot_dimension_numbers<[1], [0], [0], [1], [0, 0, 1, 1], [], []>} : vector<16x128xbf16>, vector<128x128xbf16>, vector<16x128xf32> -> vector<16x128xf32>
    %180 = arith.addf %176, %179 : vector<16x128xf32>
    %181 = arith.addf %180, %6 : vector<16x128xf32>
    %182 = arith.negf %181 : vector<16x128xf32>
    %183 = math.exp %182 : vector<16x128xf32>
    %cst_83 = arith.constant 1.000000e+00 : f32
    %184 = vector.broadcast %cst_83 : f32 to vector<16x128xf32>
    %185 = arith.addf %184, %183 : vector<16x128xf32>
    %186 = arith.divf %184, %185 : vector<16x128xf32>
    %c96_i32_84 = arith.constant 96 : i32
    %187 = tpu.dynamic_rotate %186 by %c96_i32_84 dim 1 : vector<16x128xf32>, i32 -> vector<16x128xf32>
    %c64_i32_85 = arith.constant 64 : i32
    %188 = tpu.dynamic_rotate %176 by %c64_i32_85 dim 1 : vector<16x128xf32>, i32 -> vector<16x128xf32>
    %c64_i32_86 = arith.constant 64 : i32
    %189 = tpu.dynamic_rotate %179 by %c64_i32_86 dim 1 : vector<16x128xf32>, i32 -> vector<16x128xf32>
    %190 = arith.addf %188, %9 : vector<16x128xf32>
    %191 = arith.addf %189, %12 : vector<16x128xf32>
    %192 = arith.mulf %186, %191 : vector<16x128xf32>
    %193 = arith.addf %190, %192 : vector<16x128xf32>
    %194 = math.tanh %193 : vector<16x128xf32>
    %cst_87 = arith.constant 1.000000e+00 : f32
    %195 = vector.broadcast %cst_87 : f32 to vector<16x128xf32>
    %196 = arith.subf %195, %187 : vector<16x128xf32>
    %197 = arith.mulf %196, %194 : vector<16x128xf32>
    %198 = arith.mulf %187, %172 : vector<16x128xf32>
    %199 = arith.addf %197, %198 : vector<16x128xf32>
    %c6 = arith.constant 6 : index
    %c0_88 = arith.constant 0 : index
    %c0_89 = arith.constant 0 : index
    %200 = vector.load %arg7[%c6, %c0_88, %c0_89] : memref<8x16x128xf32, #tpu.memory_space<vmem>>, vector<1x16x128xf32>
    %201 = vector.shape_cast %200 : vector<1x16x128xf32> to vector<16x128xf32>
    %202 = vector.shape_cast %199 : vector<16x128xf32> to vector<1x16x128xf32>
    tpu.vector_store %arg7[%c6, %c0_88, %c0_89], %202 {strides = array<i32>} : memref<8x16x128xf32, #tpu.memory_space<vmem>>, vector<1x16x128xf32>,
    %c112 = arith.constant 112 : index
    %c0_90 = arith.constant 0 : index
    %203 = vector.load %arg8[%c112, %c0_90] : memref<128x128xf32, #tpu.memory_space<vmem>>, vector<16x128xf32>
    %204 = arith.truncf %199 : vector<16x128xf32> to vector<16x128xbf16>
    %c0_91 = arith.constant 0 : index
    %c0_92 = arith.constant 0 : index
    %205 = vector.load %arg3[%c0_91, %c0_92] : memref<128x128xbf16, #tpu.memory_space<vmem>>, vector<128x128xbf16>
    %cst_93 = arith.constant dense<0.000000e+00> : vector<16x128xf32>
    %206 = tpu.matmul %204, %205, %cst_93 {dimension_numbers = #tpu.dot_dimension_numbers<[1], [0], [0], [1], [0, 0, 1, 1], [], []>} : vector<16x128xbf16>, vector<128x128xbf16>, vector<16x128xf32> -> vector<16x128xf32>
    %207 = arith.addf %203, %206 : vector<16x128xf32>
    %208 = arith.addf %207, %6 : vector<16x128xf32>
    %209 = arith.negf %208 : vector<16x128xf32>
    %210 = math.exp %209 : vector<16x128xf32>
    %cst_94 = arith.constant 1.000000e+00 : f32
    %211 = vector.broadcast %cst_94 : f32 to vector<16x128xf32>
    %212 = arith.addf %211, %210 : vector<16x128xf32>
    %213 = arith.divf %211, %212 : vector<16x128xf32>
    %c96_i32_95 = arith.constant 96 : i32
    %214 = tpu.dynamic_rotate %213 by %c96_i32_95 dim 1 : vector<16x128xf32>, i32 -> vector<16x128xf32>
    %c64_i32_96 = arith.constant 64 : i32
    %215 = tpu.dynamic_rotate %203 by %c64_i32_96 dim 1 : vector<16x128xf32>, i32 -> vector<16x128xf32>
    %c64_i32_97 = arith.constant 64 : i32
    %216 = tpu.dynamic_rotate %206 by %c64_i32_97 dim 1 : vector<16x128xf32>, i32 -> vector<16x128xf32>
    %217 = arith.addf %215, %9 : vector<16x128xf32>
    %218 = arith.addf %216, %12 : vector<16x128xf32>
    %219 = arith.mulf %213, %218 : vector<16x128xf32>
    %220 = arith.addf %217, %219 : vector<16x128xf32>
    %221 = math.tanh %220 : vector<16x128xf32>
    %cst_98 = arith.constant 1.000000e+00 : f32
    %222 = vector.broadcast %cst_98 : f32 to vector<16x128xf32>
    %223 = arith.subf %222, %214 : vector<16x128xf32>
    %224 = arith.mulf %223, %221 : vector<16x128xf32>
    %225 = arith.mulf %214, %199 : vector<16x128xf32>
    %226 = arith.addf %224, %225 : vector<16x128xf32>
    %c7 = arith.constant 7 : index
    %c0_99 = arith.constant 0 : index
    %c0_100 = arith.constant 0 : index
    %227 = vector.load %arg7[%c7, %c0_99, %c0_100] : memref<8x16x128xf32, #tpu.memory_space<vmem>>, vector<1x16x128xf32>
    %228 = vector.shape_cast %227 : vector<1x16x128xf32> to vector<16x128xf32>
    %229 = vector.shape_cast %226 : vector<16x128xf32> to vector<1x16x128xf32>
    tpu.vector_store %arg7[%c7, %c0_99, %c0_100], %229 {strides = array<i32>} : memref<8x16x128xf32, #tpu.memory_space<vmem>>, vector<1x16x128xf32>,
    return
  }
}

</mosaic_0001>

<llo_original>
// kernel: tpu_custom_call.1
$region0: #{tpu_custom_call.1}
  #allocation0 [shape = 'u32[]', space=smem, size = 0x4, offset = 0x4, fixed_abs, tag = 'smem constant byte address 0x4 - core index']
  #allocation1 [shape = 'u32[144,128]{1,0:T(1,128)}', space=vmem, size = 0x12000, scoped, tag = 'internal scratch']
  #allocation2 [shape = 'f32[128,128]{1,0:T(8,128)}', space=vmem, size = 0x10000, scoped, tag = 'scratch operand']
  %s0 = inlined_call_operand.hbm [shape: bf16[128,128], index: 0, kind: input, shape index: {}]
  %s1 = inlined_call_operand.hbm [shape: f32[16,128], index: 1, kind: input, shape index: {}]
  %s2 = inlined_call_operand.hbm [shape: bf16[128,128], index: 2, kind: input, shape index: {}]
  %s3 = inlined_call_operand.hbm [shape: bf16[128,128], index: 3, kind: input, shape index: {}]
  %s4 = inlined_call_operand.vmem [shape: f32[1,128], index: 4, kind: input, shape index: {}]
  %s5 = inlined_call_operand.vmem [shape: f32[1,128], index: 5, kind: input, shape index: {}]
  %s6 = inlined_call_operand.vmem [shape: f32[1,128], index: 6, kind: input, shape index: {}]
  %s7 = inlined_call_operand.hbm [shape: f32[8,16,128], index: 7, kind: output, shape index: {}]
  %s8 = sld [smem:[#allocation0]]
  $region54: #{tpu_custom_call.1} parent=0
    _
  %s10 = ssub.s32 1, %s8
  %s11 = scalar_select 0, %s10, %s8
  $region1: #{tpu_custom_call.1} parent=0
    #allocation3 [shape = 'u8[32768]{0}', space=vmem, size = 0x8000, scoped, tag = 'input window, operand 0, single buffered']
    #allocation4 [shape = 's32[1]{0}', space=sflag, size = 0x4, scoped, tag = 'scoped memory for tpu_custom_call.1']
    #allocation5 [shape = 's32[1]{0}', space=sflag, size = 0x4, scoped, tag = 'scoped memory for tpu_custom_call.1']
    #allocation6 [shape = 'u8[8192]{0}', space=vmem, size = 0x2000, scoped, tag = 'input window, operand 1, single buffered']
    #allocation7 [shape = 's32[1]{0}', space=sflag, size = 0x4, scoped, tag = 'scoped memory for tpu_custom_call.1']
    #allocation8 [shape = 'u8[32768]{0}', space=vmem, size = 0x8000, scoped, tag = 'input window, operand 2, single buffered']
    #allocation9 [shape = 'u8[32768]{0}', space=vmem, size = 0x8000, scoped, tag = 'input window, operand 3, single buffered']
    #allocation10 [shape = 's32[1]{0}', space=sflag, size = 0x4, scoped, tag = 'scoped memory for tpu_custom_call.1']
    #allocation11 [shape = 'u8[65536]{0}', space=vmem, size = 0x10000, scoped, tag = 'output window, operand 0, single buffered']
    %12 = vsyncpa [#allocation4], 0
    %13 = vsyncpa [#allocation7], 0
    %14 = vsyncpa [#allocation10], 0
    %15 = vsyncpa [#allocation5], 0
    // Predicated region
    $region2: #{tpu_custom_call.1} parent=1 // pred_check
      _
    $region3: #{tpu_custom_call.1} parent=1 // pred_check_branch
      %17 = sbr.rel (0) target = $region5
    $region4: #{tpu_custom_call.1} parent=1 // pred_region
      %s19 = ssub.s32 1024, 1024
      %20 = vsyncadd [#allocation4], %s19
      %s21 = sshll.u32 [#allocation3], 4
      %s22 = int_to_ptr.vmem [resolvable:$true] %s21
      %27 = dma.hbm_to_vmem [thread:$0]  %s0, 1024, %s22, [#allocation4], 64, 64, 4
    $region5: #{tpu_custom_call.1} parent=1 // pred_fallthru
      _
    // Predicated region
    $region6: #{tpu_custom_call.1} parent=1 // pred_check
      _
    $region7: #{tpu_custom_call.1} parent=1 // pred_check_branch
      %29 = sbr.rel (0) target = $region9
    $region8: #{tpu_custom_call.1} parent=1 // pred_region
      %s31 = ssub.s32 256, 256
      %32 = vsyncadd [#allocation7], %s31
      %s33 = sshll.u32 [#allocation6], 4
      %s34 = int_to_ptr.vmem [resolvable:$true] %s33
      %39 = dma.hbm_to_vmem [thread:$0]  %s1, 256, %s34, [#allocation7], 128, 128, 8
    $region9: #{tpu_custom_call.1} parent=1 // pred_fallthru
      _
    // Predicated region
    $region10: #{tpu_custom_call.1} parent=1 // pred_check
      _
    $region11: #{tpu_custom_call.1} parent=1 // pred_check_branch
      %41 = sbr.rel (0) target = $region13
    $region12: #{tpu_custom_call.1} parent=1 // pred_region
      %s43 = ssub.s32 1024, 1024
      %44 = vsyncadd [#allocation7], %s43
      %s45 = sshll.u32 [#allocation8], 4
      %s46 = int_to_ptr.vmem [resolvable:$true] %s45
      %51 = dma.hbm_to_vmem [thread:$0]  %s2, 1024, %s46, [#allocation7], 64, 64, 4
    $region13: #{tpu_custom_call.1} parent=1 // pred_fallthru
      _
    // Predicated region
    $region14: #{tpu_custom_call.1} parent=1 // pred_check
      _
    $region15: #{tpu_custom_call.1} parent=1 // pred_check_branch
      %53 = sbr.rel (0) target = $region17
    $region16: #{tpu_custom_call.1} parent=1 // pred_region
      %s55 = ssub.s32 1024, 1024
      %56 = vsyncadd [#allocation10], %s55
      %s57 = sshll.u32 [#allocation9], 4
      %s58 = int_to_ptr.vmem [resolvable:$true] %s57
      %63 = dma.hbm_to_vmem [thread:$0]  %s3, 1024, %s58, [#allocation10], 64, 64, 4
    $region17: #{tpu_custom_call.1} parent=1 // pred_fallthru
      _
    // Predicated region
    $region18: #{tpu_custom_call.1} parent=1 // pred_check
      _
    $region19: #{tpu_custom_call.1} parent=1 // pred_check_branch
      %65 = sbr.rel (0) target = $region21
    $region20: #{tpu_custom_call.1} parent=1 // pred_region
      _
    $region21: #{tpu_custom_call.1} parent=1 // pred_fallthru
      _
    // Predicated region
    $region22: #{tpu_custom_call.1} parent=1 // pred_check
      _
    $region23: #{tpu_custom_call.1} parent=1 // pred_check_branch
      %67 = sbr.rel (0) target = $region25
    $region24: #{tpu_custom_call.1} parent=1 // pred_region
      _
    $region25: #{tpu_custom_call.1} parent=1 // pred_fallthru
      _
    // Predicated region
    $region26: #{tpu_custom_call.1} parent=1 // pred_check
      _
    $region27: #{tpu_custom_call.1} parent=1 // pred_check_branch
      %69 = sbr.rel (0) target = $region29
    $region28: #{tpu_custom_call.1} parent=1 // pred_region
      _
    $region29: #{tpu_custom_call.1} parent=1 // pred_fallthru
      _
    // Predicated region
    $region30: #{tpu_custom_call.1} parent=1 // pred_check
      _
    $region31: #{tpu_custom_call.1} parent=1 // pred_check_branch
      %71 = sbr.rel (0) target = $region33
    $region32: #{tpu_custom_call.1} parent=1 // pred_region
      %72 = dma.done [#allocation4], 1024
    $region33: #{tpu_custom_call.1} parent=1 // pred_fallthru
      _
    // Predicated region
    $region34: #{tpu_custom_call.1} parent=1 // pred_check
      _
    $region35: #{tpu_custom_call.1} parent=1 // pred_check_branch
      %74 = sbr.rel (0) target = $region37
    $region36: #{tpu_custom_call.1} parent=1 // pred_region
      %75 = dma.done [#allocation7], 256
    $region37: #{tpu_custom_call.1} parent=1 // pred_fallthru
      _
    // Predicated region
    $region38: #{tpu_custom_call.1} parent=1 // pred_check
      _
    $region39: #{tpu_custom_call.1} parent=1 // pred_check_branch
      %77 = sbr.rel (0) target = $region41
    $region40: #{tpu_custom_call.1} parent=1 // pred_region
      %78 = dma.done [#allocation7], 1024
    $region41: #{tpu_custom_call.1} parent=1 // pred_fallthru
      _
    // Predicated region
    $region42: #{tpu_custom_call.1} parent=1 // pred_check
      _
    $region43: #{tpu_custom_call.1} parent=1 // pred_check_branch
      %80 = sbr.rel (0) target = $region45
    $region44: #{tpu_custom_call.1} parent=1 // pred_region
      %81 = dma.done [#allocation10], 1024
    $region45: #{tpu_custom_call.1} parent=1 // pred_fallthru
      _
    %v83 = vld [vmem:[#allocation3] sm:$0xf]
    %v84 = vld [vmem:[#allocation3 + $0x4] sm:$0xf]
    %v85 = vld [vmem:[#allocation3 + $0x8] sm:$0xf]
    %v86 = vld [vmem:[#allocation3 + $0xc] sm:$0xf]
    %v87 = vld [vmem:[#allocation3 + $0x10] sm:$0xf]
    %v88 = vld [vmem:[#allocation3 + $0x14] sm:$0xf]
    %v89 = vld [vmem:[#allocation3 + $0x18] sm:$0xf]
    %v90 = vld [vmem:[#allocation3 + $0x1c] sm:$0xf]
    %v91 = vld [vmem:[#allocation3 + $0x20] sm:$0xf]
    %v92 = vld [vmem:[#allocation3 + $0x24] sm:$0xf]
    %v93 = vld [vmem:[#allocation3 + $0x28] sm:$0xf]
    %v94 = vld [vmem:[#allocation3 + $0x2c] sm:$0xf]
    %v95 = vld [vmem:[#allocation3 + $0x30] sm:$0xf]
    %v96 = vld [vmem:[#allocation3 + $0x34] sm:$0xf]
    %v97 = vld [vmem:[#allocation3 + $0x38] sm:$0xf]
    %v98 = vld [vmem:[#allocation3 + $0x3c] sm:$0xf]
    %v99 = vld [vmem:[#allocation8] sm:$0xf]
    %v100 = vld [vmem:[#allocation8 + $0x4] sm:$0xf]
    %v101 = vld [vmem:[#allocation8 + $0x8] sm:$0xf]
    %v102 = vld [vmem:[#allocation8 + $0xc] sm:$0xf]
    %v103 = vld [vmem:[#allocation8 + $0x10] sm:$0xf]
    %v104 = vld [vmem:[#allocation8 + $0x14] sm:$0xf]
    %v105 = vld [vmem:[#allocation8 + $0x18] sm:$0xf]
    %v106 = vld [vmem:[#allocation8 + $0x1c] sm:$0xf]
    %v107 = vld [vmem:[#allocation8 + $0x20] sm:$0xf]
    %v108 = vld [vmem:[#allocation8 + $0x24] sm:$0xf]
    %v109 = vld [vmem:[#allocation8 + $0x28] sm:$0xf]
    %v110 = vld [vmem:[#allocation8 + $0x2c] sm:$0xf]
    %v111 = vld [vmem:[#allocation8 + $0x30] sm:$0xf]
    %v112 = vld [vmem:[#allocation8 + $0x34] sm:$0xf]
    %v113 = vld [vmem:[#allocation8 + $0x38] sm:$0xf]
    %v114 = vld [vmem:[#allocation8 + $0x3c] sm:$0xf]
    %v131 = vunpack.c.l.b16 %v83
    %v132 = vunpack.c.l.b16 %v84
    %v133 = vunpack.c.l.b16 %v85
    %v134 = vunpack.c.l.b16 %v86
    %v135 = vunpack.c.l.b16 %v87
    %v136 = vunpack.c.l.b16 %v88
    %v137 = vunpack.c.l.b16 %v89
    %v138 = vunpack.c.l.b16 %v90
    %v139 = vunpack.c.l.b16 %v91
    %v140 = vunpack.c.l.b16 %v92
    %v141 = vunpack.c.l.b16 %v93
    %v142 = vunpack.c.l.b16 %v94
    %v143 = vunpack.c.l.b16 %v95
    %v144 = vunpack.c.l.b16 %v96
    %v145 = vunpack.c.l.b16 %v97
    %v146 = vunpack.c.l.b16 %v98
    %v147 = vpack.c.b16 %v132, %v131
    %v148 = vpack.c.b16 %v134, %v133
    %v149 = vpack.c.b16 %v136, %v135
    %v150 = vpack.c.b16 %v138, %v137
    %v151 = vpack.c.b16 %v140, %v139
    %v152 = vpack.c.b16 %v142, %v141
    %v153 = vpack.c.b16 %v144, %v143
    %v154 = vpack.c.b16 %v146, %v145
    %v179 = vunpack.c.l.b16 %v99
    %v180 = vunpack.c.l.b16 %v100
    %v181 = vunpack.c.l.b16 %v101
    %v182 = vunpack.c.l.b16 %v102
    %v183 = vunpack.c.l.b16 %v103
    %v184 = vunpack.c.l.b16 %v104
    %v185 = vunpack.c.l.b16 %v105
    %v186 = vunpack.c.l.b16 %v106
    %v187 = vunpack.c.l.b16 %v107
    %v188 = vunpack.c.l.b16 %v108
    %v189 = vunpack.c.l.b16 %v109
    %v190 = vunpack.c.l.b16 %v110
    %v191 = vunpack.c.l.b16 %v111
    %v192 = vunpack.c.l.b16 %v112
    %v193 = vunpack.c.l.b16 %v113
    %v194 = vunpack.c.l.b16 %v114
    %v195 = vpack.c.b16 %v180, %v179
    %v196 = vpack.c.b16 %v182, %v181
    %v197 = vpack.c.b16 %v184, %v183
    %v198 = vpack.c.b16 %v186, %v185
    %v199 = vpack.c.b16 %v188, %v187
    %v200 = vpack.c.b16 %v190, %v189
    %v201 = vpack.c.b16 %v192, %v191
    %v202 = vpack.c.b16 %v194, %v193
    %211 = vmatprep.subr.bf16.mxu0 0
    %212 = vmatpush1.bf16.msra.mxu0 %v202
    %213 = vmatprep.subr.bf16.mxu0 0
    %214 = vmatpush1.bf16.msra.mxu0 %v201
    %215 = vmatprep.subr.bf16.mxu0 0
    %216 = vmatpush1.bf16.msra.mxu0 %v200
    %217 = vmatprep.subr.bf16.mxu0 0
    %218 = vmatpush1.bf16.msra.mxu0 %v199
    %219 = vmatprep.subr.bf16.mxu0 0
    %220 = vmatpush1.bf16.msra.mxu0 %v198
    %221 = vmatprep.subr.bf16.mxu0 0
    %222 = vmatpush1.bf16.msra.mxu0 %v197
    %223 = vmatprep.subr.bf16.mxu0 0
    %224 = vmatpush1.bf16.msra.mxu0 %v196
    %225 = vmatprep.subr.bf16.mxu0 0
    %226 = vmatpush1.bf16.msra.mxu0 %v195
    %227 = vmatprep.subr.bf16.mxu0 0
    %228 = vmatpush2.bf16.msra.mxu0 0
    %229 = vmatprep.subr.bf16.mxu0 0
    %230 = vmatpush2.bf16.msra.mxu0 0
    %231 = vmatprep.subr.bf16.mxu0 0
    %232 = vmatpush2.bf16.msra.mxu0 0
    %233 = vmatprep.subr.bf16.mxu0 0
    %234 = vmatpush2.bf16.msra.mxu0 0
    %235 = vmatprep.subr.bf16.mxu0 0
    %236 = vmatpush2.bf16.msra.mxu0 0
    %237 = vmatprep.subr.bf16.mxu0 0
    %238 = vmatpush2.bf16.msra.mxu0 0
    %239 = vmatprep.subr.bf16.mxu0 0
    %240 = vmatpush2.bf16.msra.mxu0 0
    %241 = vmatprep.subr.bf16.mxu0 0
    %242 = vmatpush2.bf16.msra.mxu0 0
    %243 = vmatprep.mubr.bf16.mxu0 0
    %244 = vmatmul.mubr.bf16.gmra.mxu0 %v147
    %v245 = vpop.f32.mrf.mxu0
    %v246 = vadd.f32 0.0, %v245
    %v247 = vpop.f32.mrf.mxu0
    %v248 = vpop.f32.mrf.mxu0
    %v249 = vadd.f32 0.0, %v248
    %v250 = vpop.f32.mrf.mxu0
    %251 = vmatprep.mubr.bf16.mxu0 0
    %252 = vmatmul.mubr.bf16.gmra.mxu0 %v148
    %v253 = vpop.f32.mrf.mxu0
    %v254 = vadd.f32 0.0, %v253
    %v255 = vpop.f32.mrf.mxu0
    %v256 = vpop.f32.mrf.mxu0
    %v257 = vadd.f32 0.0, %v256
    %v258 = vpop.f32.mrf.mxu0
    %259 = vmatprep.mubr.bf16.mxu0 0
    %260 = vmatmul.mubr.bf16.gmra.mxu0 %v149
    %v261 = vpop.f32.mrf.mxu0
    %v262 = vadd.f32 0.0, %v261
    %v263 = vpop.f32.mrf.mxu0
    %v264 = vpop.f32.mrf.mxu0
    %v265 = vadd.f32 0.0, %v264
    %v266 = vpop.f32.mrf.mxu0
    %267 = vmatprep.mubr.bf16.mxu0 0
    %268 = vmatmul.mubr.bf16.gmra.mxu0 %v150
    %v269 = vpop.f32.mrf.mxu0
    %v270 = vadd.f32 0.0, %v269
    %v271 = vpop.f32.mrf.mxu0
    %v272 = vpop.f32.mrf.mxu0
    %v273 = vadd.f32 0.0, %v272
    %v274 = vpop.f32.mrf.mxu0
    %275 = vmatprep.mubr.bf16.mxu0 0
    %276 = vmatmul.mubr.bf16.gmra.mxu0 %v151
    %v277 = vpop.f32.mrf.mxu0
    %v278 = vadd.f32 0.0, %v277
    %v279 = vpop.f32.mrf.mxu0
    %v280 = vpop.f32.mrf.mxu0
    %v281 = vadd.f32 0.0, %v280
    %v282 = vpop.f32.mrf.mxu0
    %283 = vmatprep.mubr.bf16.mxu0 0
    %284 = vmatmul.mubr.bf16.gmra.mxu0 %v152
    %v285 = vpop.f32.mrf.mxu0
    %v286 = vadd.f32 0.0, %v285
    %v287 = vpop.f32.mrf.mxu0
    %v288 = vpop.f32.mrf.mxu0
    %v289 = vadd.f32 0.0, %v288
    %v290 = vpop.f32.mrf.mxu0
    %291 = vmatprep.mubr.bf16.mxu0 0
    %292 = vmatmul.mubr.bf16.gmra.mxu0 %v153
    %v293 = vpop.f32.mrf.mxu0
    %v294 = vadd.f32 0.0, %v293
    %v295 = vpop.f32.mrf.mxu0
    %v296 = vpop.f32.mrf.mxu0
    %v297 = vadd.f32 0.0, %v296
    %v298 = vpop.f32.mrf.mxu0
    %299 = vmatprep.mubr.bf16.mxu0 0
    %300 = vmatmul.mubr.bf16.gmra.mxu0 %v154
    %v301 = vpop.f32.mrf.mxu0
    %v302 = vadd.f32 0.0, %v301
    %v303 = vpop.f32.mrf.mxu0
    %v304 = vpop.f32.mrf.mxu0
    %v305 = vadd.f32 0.0, %v304
    %v306 = vpop.f32.mrf.mxu0
    %307 = vdwg.mxu0
    %308 = vst [vmem:[#allocation2] sm:$0xff] %v246
    %309 = vst [vmem:[#allocation2 + $0x8] sm:$0xff] %v249
    %310 = vst [vmem:[#allocation2 + $0x10] sm:$0xff] %v254
    %311 = vst [vmem:[#allocation2 + $0x18] sm:$0xff] %v257
    %312 = vst [vmem:[#allocation2 + $0x20] sm:$0xff] %v262
    %313 = vst [vmem:[#allocation2 + $0x28] sm:$0xff] %v265
    %314 = vst [vmem:[#allocation2 + $0x30] sm:$0xff] %v270
    %315 = vst [vmem:[#allocation2 + $0x38] sm:$0xff] %v273
    %316 = vst [vmem:[#allocation2 + $0x40] sm:$0xff] %v278
    %317 = vst [vmem:[#allocation2 + $0x48] sm:$0xff] %v281
    %318 = vst [vmem:[#allocation2 + $0x50] sm:$0xff] %v286
    %319 = vst [vmem:[#allocation2 + $0x58] sm:$0xff] %v289
    %320 = vst [vmem:[#allocation2 + $0x60] sm:$0xff] %v294
    %321 = vst [vmem:[#allocation2 + $0x68] sm:$0xff] %v297
    %322 = vst [vmem:[#allocation2 + $0x70] sm:$0xff] %v302
    %323 = vst [vmem:[#allocation2 + $0x78] sm:$0xff] %v305
    %v324 = vld [vmem:[%s4] sm:$0x1]
    %v326 = vlaneseq
    %v327 = vshrl.u32 %v326, 7
    %v328 = vsub.s32 0, %v327
    %v329 = vrot.slane %v324, %v328
    %v331 = vld [vmem:[%s5] sm:$0x1]
    %v333 = vlaneseq
    %v334 = vshrl.u32 %v333, 7
    %v335 = vsub.s32 0, %v334
    %v336 = vrot.slane %v331, %v335
    %v338 = vld [vmem:[%s6] sm:$0x1]
    %v340 = vlaneseq
    %v341 = vshrl.u32 %v340, 7
    %v342 = vsub.s32 0, %v341
    %v343 = vrot.slane %v338, %v342
    %v345 = vld [vmem:[#allocation6] sm:$0xff]
    %v346 = vld [vmem:[#allocation6 + $0x8] sm:$0xff]
    %v347 = vld [vmem:[#allocation2] sm:$0xff]
    %v348 = vld [vmem:[#allocation2 + $0x8] sm:$0xff]
    %v349 = vpack.c.bf16 %v346, %v345
    %v350 = vld [vmem:[#allocation9] sm:$0xf]
    %v351 = vld [vmem:[#allocation9 + $0x4] sm:$0xf]
    %v352 = vld [vmem:[#allocation9 + $0x8] sm:$0xf]
    %v353 = vld [vmem:[#allocation9 + $0xc] sm:$0xf]
    %v354 = vld [vmem:[#allocation9 + $0x10] sm:$0xf]
    %v355 = vld [vmem:[#allocation9 + $0x14] sm:$0xf]
    %v356 = vld [vmem:[#allocation9 + $0x18] sm:$0xf]
    %v357 = vld [vmem:[#allocation9 + $0x1c] sm:$0xf]
    %v358 = vld [vmem:[#allocation9 + $0x20] sm:$0xf]
    %v359 = vld [vmem:[#allocation9 + $0x24] sm:$0xf]
    %v360 = vld [vmem:[#allocation9 + $0x28] sm:$0xf]
    %v361 = vld [vmem:[#allocation9 + $0x2c] sm:$0xf]
    %v362 = vld [vmem:[#allocation9 + $0x30] sm:$0xf]
    %v363 = vld [vmem:[#allocation9 + $0x34] sm:$0xf]
    %v364 = vld [vmem:[#allocation9 + $0x38] sm:$0xf]
    %v365 = vld [vmem:[#allocation9 + $0x3c] sm:$0xf]
    %v382 = vunpack.c.l.b16 %v350
    %v383 = vunpack.c.l.b16 %v351
    %v384 = vunpack.c.l.b16 %v352
    %v385 = vunpack.c.l.b16 %v353
    %v386 = vunpack.c.l.b16 %v354
    %v387 = vunpack.c.l.b16 %v355
    %v388 = vunpack.c.l.b16 %v356
    %v389 = vunpack.c.l.b16 %v357
    %v390 = vunpack.c.l.b16 %v358
    %v391 = vunpack.c.l.b16 %v359
    %v392 = vunpack.c.l.b16 %v360
    %v393 = vunpack.c.l.b16 %v361
    %v394 = vunpack.c.l.b16 %v362
    %v395 = vunpack.c.l.b16 %v363
    %v396 = vunpack.c.l.b16 %v364
    %v397 = vunpack.c.l.b16 %v365
    %v398 = vpack.c.b16 %v383, %v382
    %v399 = vpack.c.b16 %v385, %v384
    %v400 = vpack.c.b16 %v387, %v386
    %v401 = vpack.c.b16 %v389, %v388
    %v402 = vpack.c.b16 %v391, %v390
    %v403 = vpack.c.b16 %v393, %v392
    %v404 = vpack.c.b16 %v395, %v394
    %v405 = vpack.c.b16 %v397, %v396
    %414 = vmatprep.subr.bf16.mxu0 0
    %415 = vmatpush1.bf16.msra.mxu0 %v405
    %416 = vmatprep.subr.bf16.mxu0 0
    %417 = vmatpush1.bf16.msra.mxu0 %v404
    %418 = vmatprep.subr.bf16.mxu0 0
    %419 = vmatpush1.bf16.msra.mxu0 %v403
    %420 = vmatprep.subr.bf16.mxu0 0
    %421 = vmatpush1.bf16.msra.mxu0 %v402
    %422 = vmatprep.subr.bf16.mxu0 0
    %423 = vmatpush1.bf16.msra.mxu0 %v401
    %424 = vmatprep.subr.bf16.mxu0 0
    %425 = vmatpush1.bf16.msra.mxu0 %v400
    %426 = vmatprep.subr.bf16.mxu0 0
    %427 = vmatpush1.bf16.msra.mxu0 %v399
    %428 = vmatprep.subr.bf16.mxu0 0
    %429 = vmatpush1.bf16.msra.mxu0 %v398
    %430 = vmatprep.subr.bf16.mxu0 0
    %431 = vmatpush2.bf16.msra.mxu0 0
    %432 = vmatprep.subr.bf16.mxu0 0
    %433 = vmatpush2.bf16.msra.mxu0 0
    %434 = vmatprep.subr.bf16.mxu0 0
    %435 = vmatpush2.bf16.msra.mxu0 0
    %436 = vmatprep.subr.bf16.mxu0 0
    %437 = vmatpush2.bf16.msra.mxu0 0
    %438 = vmatprep.subr.bf16.mxu0 0
    %439 = vmatpush2.bf16.msra.mxu0 0
    %440 = vmatprep.subr.bf16.mxu0 0
    %441 = vmatpush2.bf16.msra.mxu0 0
    %442 = vmatprep.subr.bf16.mxu0 0
    %443 = vmatpush2.bf16.msra.mxu0 0
    %444 = vmatprep.subr.bf16.mxu0 0
    %445 = vmatpush2.bf16.msra.mxu0 0
    %446 = vmatprep.mubr.bf16.mxu0 0
    %447 = vmatmul.mubr.bf16.gmra.mxu0 %v349
    %v448 = vpop.f32.mrf.mxu0
    %v449 = vadd.f32 0.0, %v448
    %v450 = vpop.f32.mrf.mxu0
    %v451 = vpop.f32.mrf.mxu0
    %v452 = vadd.f32 0.0, %v451
    %v453 = vpop.f32.mrf.mxu0
    %454 = vdwg.mxu0
    %v455 = vadd.f32 %v347, %v449
    %v456 = vadd.f32 %v348, %v452
    %v457 = vadd.f32 %v455, %v329
    %v458 = vadd.f32 %v456, %v329
    %v459 = vxor.u32 %v457, 2147483648
    %v460 = vxor.u32 %v458, 2147483648
    %v461 = vmul.f32 %v459, 1.442695
    %v462 = vpow.pop %v461
    %v463 = vmul.f32 %v460, 1.442695
    %v464 = vpow.pop %v463
    %v465 = vadd.f32 %v462, 1.0
    %v466 = vadd.f32 %v464, 1.0
    %v467 = vrcp.pop %v465
    %v468 = vmul.f32 1.0, %v467
    %v469 = vrcp.pop %v466
    %v470 = vmul.f32 1.0, %v469
    %471 = vrot.lane.b32.xlu0 %v468, 96
    %v472 = vpop.permute.xlu0 %471
    %473 = vrot.lane.b32.xlu0 %v470, 96
    %v474 = vpop.permute.xlu0 %473
    %475 = vrot.lane.b32.xlu0 %v347, 64
    %v476 = vpop.permute.xlu0 %475
    %477 = vrot.lane.b32.xlu0 %v348, 64
    %v478 = vpop.permute.xlu0 %477
    %479 = vrot.lane.b32.xlu0 %v449, 64
    %v480 = vpop.permute.xlu0 %479
    %481 = vrot.lane.b32.xlu0 %v452, 64
    %v482 = vpop.permute.xlu0 %481
    %v483 = vadd.f32 %v476, %v336
    %v484 = vadd.f32 %v478, %v336
    %v485 = vadd.f32 %v480, %v343
    %v486 = vadd.f32 %v482, %v343
    %v487 = vmul.f32 %v468, %v485
    %v488 = vmul.f32 %v470, %v486
    %v489 = vadd.f32 %v483, %v487
    %v490 = vadd.f32 %v484, %v488
    %v491 = vtanh.pop %v489
    %v492 = vtanh.pop %v490
    %v493 = vsub.f32 1.0, %v472
    %v494 = vsub.f32 1.0, %v474
    %v495 = vmul.f32 %v493, %v491
    %v496 = vmul.f32 %v494, %v492
    %v497 = vmul.f32 %v472, %v345
    %v498 = vmul.f32 %v474, %v346
    %v499 = vadd.f32 %v495, %v497
    %v500 = vadd.f32 %v496, %v498
    %501 = vst [vmem:[#allocation11] sm:$0xff] %v499
    %502 = vst [vmem:[#allocation11 + $0x8] sm:$0xff] %v500
    %v503 = vld [vmem:[#allocation2 + $0x10] sm:$0xff]
    %v504 = vld [vmem:[#allocation2 + $0x18] sm:$0xff]
    %v505 = vpack.c.bf16 %v500, %v499
    %v506 = vld [vmem:[#allocation9] sm:$0xf]
    %v507 = vld [vmem:[#allocation9 + $0x4] sm:$0xf]
    %v508 = vld [vmem:[#allocation9 + $0x8] sm:$0xf]
    %v509 = vld [vmem:[#allocation9 + $0xc] sm:$0xf]
    %v510 = vld [vmem:[#allocation9 + $0x10] sm:$0xf]
    %v511 = vld [vmem:[#allocation9 + $0x14] sm:$0xf]
    %v512 = vld [vmem:[#allocation9 + $0x18] sm:$0xf]
    %v513 = vld [vmem:[#allocation9 + $0x1c] sm:$0xf]
    %v514 = vld [vmem:[#allocation9 + $0x20] sm:$0xf]
    %v515 = vld [vmem:[#allocation9 + $0x24] sm:$0xf]
    %v516 = vld [vmem:[#allocation9 + $0x28] sm:$0xf]
    %v517 = vld [vmem:[#allocation9 + $0x2c] sm:$0xf]
    %v518 = vld [vmem:[#allocation9 + $0x30] sm:$0xf]
    %v519 = vld [vmem:[#allocation9 + $0x34] sm:$0xf]
    %v520 = vld [vmem:[#allocation9 + $0x38] sm:$0xf]
    %v521 = vld [vmem:[#allocation9 + $0x3c] sm:$0xf]
    %v538 = vunpack.c.l.b16 %v506
    %v539 = vunpack.c.l.b16 %v507
    %v540 = vunpack.c.l.b16 %v508
    %v541 = vunpack.c.l.b16 %v509
    %v542 = vunpack.c.l.b16 %v510
    %v543 = vunpack.c.l.b16 %v511
    %v544 = vunpack.c.l.b16 %v512
    %v545 = vunpack.c.l.b16 %v513
    %v546 = vunpack.c.l.b16 %v514
    %v547 = vunpack.c.l.b16 %v515
    %v548 = vunpack.c.l.b16 %v516
    %v549 = vunpack.c.l.b16 %v517
    %v550 = vunpack.c.l.b16 %v518
    %v551 = vunpack.c.l.b16 %v519
    %v552 = vunpack.c.l.b16 %v520
    %v553 = vunpack.c.l.b16 %v521
    %v554 = vpack.c.b16 %v539, %v538
    %v555 = vpack.c.b16 %v541, %v540
    %v556 = vpack.c.b16 %v543, %v542
    %v557 = vpack.c.b16 %v545, %v544
    %v558 = vpack.c.b16 %v547, %v546
    %v559 = vpack.c.b16 %v549, %v548
    %v560 = vpack.c.b16 %v551, %v550
    %v561 = vpack.c.b16 %v553, %v552
    %570 = vmatprep.subr.bf16.mxu0 0
    %571 = vmatpush1.bf16.msra.mxu0 %v561
    %572 = vmatprep.subr.bf16.mxu0 0
    %573 = vmatpush1.bf16.msra.mxu0 %v560
    %574 = vmatprep.subr.bf16.mxu0 0
    %575 = vmatpush1.bf16.msra.mxu0 %v559
    %576 = vmatprep.subr.bf16.mxu0 0
    %577 = vmatpush1.bf16.msra.mxu0 %v558
    %578 = vmatprep.subr.bf16.mxu0 0
    %579 = vmatpush1.bf16.msra.mxu0 %v557
    %580 = vmatprep.subr.bf16.mxu0 0
    %581 = vmatpush1.bf16.msra.mxu0 %v556
    %582 = vmatprep.subr.bf16.mxu0 0
    %583 = vmatpush1.bf16.msra.mxu0 %v555
    %584 = vmatprep.subr.bf16.mxu0 0
    %585 = vmatpush1.bf16.msra.mxu0 %v554
    %586 = vmatprep.subr.bf16.mxu0 0
    %587 = vmatpush2.bf16.msra.mxu0 0
    %588 = vmatprep.subr.bf16.mxu0 0
    %589 = vmatpush2.bf16.msra.mxu0 0
    %590 = vmatprep.subr.bf16.mxu0 0
    %591 = vmatpush2.bf16.msra.mxu0 0
    %592 = vmatprep.subr.bf16.mxu0 0
    %593 = vmatpush2.bf16.msra.mxu0 0
    %594 = vmatprep.subr.bf16.mxu0 0
    %595 = vmatpush2.bf16.msra.mxu0 0
    %596 = vmatprep.subr.bf16.mxu0 0
    %597 = vmatpush2.bf16.msra.mxu0 0
    %598 = vmatprep.subr.bf16.mxu0 0
    %599 = vmatpush2.bf16.msra.mxu0 0
    %600 = vmatprep.subr.bf16.mxu0 0
    %601 = vmatpush2.bf16.msra.mxu0 0
    %602 = vmatprep.mubr.bf16.mxu0 0
    %603 = vmatmul.mubr.bf16.gmra.mxu0 %v505
    %v604 = vpop.f32.mrf.mxu0
    %v605 = vadd.f32 0.0, %v604
    %v606 = vpop.f32.mrf.mxu0
    %v607 = vpop.f32.mrf.mxu0
    %v608 = vadd.f32 0.0, %v607
    %v609 = vpop.f32.mrf.mxu0
    %610 = vdwg.mxu0
    %v611 = vadd.f32 %v503, %v605
    %v612 = vadd.f32 %v504, %v608
    %v613 = vadd.f32 %v611, %v329
    %v614 = vadd.f32 %v612, %v329
    %v615 = vxor.u32 %v613, 2147483648
    %v616 = vxor.u32 %v614, 2147483648
    %v617 = vmul.f32 %v615, 1.442695
    %v618 = vpow.pop %v617
    %v619 = vmul.f32 %v616, 1.442695
    %v620 = vpow.pop %v619
    %v621 = vadd.f32 %v618, 1.0
    %v622 = vadd.f32 %v620, 1.0
    %v623 = vrcp.pop %v621
    %v624 = vmul.f32 1.0, %v623
    %v625 = vrcp.pop %v622
    %v626 = vmul.f32 1.0, %v625
    %627 = vrot.lane.b32.xlu0 %v624, 96
    %v628 = vpop.permute.xlu0 %627
    %629 = vrot.lane.b32.xlu0 %v626, 96
    %v630 = vpop.permute.xlu0 %629
    %631 = vrot.lane.b32.xlu0 %v503, 64
    %v632 = vpop.permute.xlu0 %631
    %633 = vrot.lane.b32.xlu0 %v504, 64
    %v634 = vpop.permute.xlu0 %633
    %635 = vrot.lane.b32.xlu0 %v605, 64
    %v636 = vpop.permute.xlu0 %635
    %637 = vrot.lane.b32.xlu0 %v608, 64
    %v638 = vpop.permute.xlu0 %637
    %v639 = vadd.f32 %v632, %v336
    %v640 = vadd.f32 %v634, %v336
    %v641 = vadd.f32 %v636, %v343
    %v642 = vadd.f32 %v638, %v343
    %v643 = vmul.f32 %v624, %v641
    %v644 = vmul.f32 %v626, %v642
    %v645 = vadd.f32 %v639, %v643
    %v646 = vadd.f32 %v640, %v644
    %v647 = vtanh.pop %v645
    %v648 = vtanh.pop %v646
    %v649 = vsub.f32 1.0, %v628
    %v650 = vsub.f32 1.0, %v630
    %v651 = vmul.f32 %v649, %v647
    %v652 = vmul.f32 %v650, %v648
    %v653 = vmul.f32 %v628, %v499
    %v654 = vmul.f32 %v630, %v500
    %v655 = vadd.f32 %v651, %v653
    %v656 = vadd.f32 %v652, %v654
    %s657 = scalar_lea.vmem [#allocation11], 16
    %658 = vst [vmem:[%s657] sm:$0xff] %v655
    %659 = vst [vmem:[%s657 + $0x8] sm:$0xff] %v656
    %v660 = vld [vmem:[#allocation2 + $0x20] sm:$0xff]
    %v661 = vld [vmem:[#allocation2 + $0x28] sm:$0xff]
    %v662 = vpack.c.bf16 %v656, %v655
    %v663 = vld [vmem:[#allocation9] sm:$0xf]
    %v664 = vld [vmem:[#allocation9 + $0x4] sm:$0xf]
    %v665 = vld [vmem:[#allocation9 + $0x8] sm:$0xf]
    %v666 = vld [vmem:[#allocation9 + $0xc] sm:$0xf]
    %v667 = vld [vmem:[#allocation9 + $0x10] sm:$0xf]
    %v668 = vld [vmem:[#allocation9 + $0x14] sm:$0xf]
    %v669 = vld [vmem:[#allocation9 + $0x18] sm:$0xf]
    %v670 = vld [vmem:[#allocation9 + $0x1c] sm:$0xf]
    %v671 = vld [vmem:[#allocation9 + $0x20] sm:$0xf]
    %v672 = vld [vmem:[#allocation9 + $0x24] sm:$0xf]
    %v673 = vld [vmem:[#allocation9 + $0x28] sm:$0xf]
    %v674 = vld [vmem:[#allocation9 + $0x2c] sm:$0xf]
    %v675 = vld [vmem:[#allocation9 + $0x30] sm:$0xf]
    %v676 = vld [vmem:[#allocation9 + $0x34] sm:$0xf]
    %v677 = vld [vmem:[#allocation9 + $0x38] sm:$0xf]
    %v678 = vld [vmem:[#allocation9 + $0x3c] sm:$0xf]
    %v695 = vunpack.c.l.b16 %v663
    %v696 = vunpack.c.l.b16 %v664
    %v697 = vunpack.c.l.b16 %v665
    %v698 = vunpack.c.l.b16 %v666
    %v699 = vunpack.c.l.b16 %v667
    %v700 = vunpack.c.l.b16 %v668
    %v701 = vunpack.c.l.b16 %v669
    %v702 = vunpack.c.l.b16 %v670
    %v703 = vunpack.c.l.b16 %v671
    %v704 = vunpack.c.l.b16 %v672
    %v705 = vunpack.c.l.b16 %v673
    %v706 = vunpack.c.l.b16 %v674
    %v707 = vunpack.c.l.b16 %v675
    %v708 = vunpack.c.l.b16 %v676
    %v709 = vunpack.c.l.b16 %v677
    %v710 = vunpack.c.l.b16 %v678
    %v711 = vpack.c.b16 %v696, %v695
    %v712 = vpack.c.b16 %v698, %v697
    %v713 = vpack.c.b16 %v700, %v699
    %v714 = vpack.c.b16 %v702, %v701
    %v715 = vpack.c.b16 %v704, %v703
    %v716 = vpack.c.b16 %v706, %v705
    %v717 = vpack.c.b16 %v708, %v707
    %v718 = vpack.c.b16 %v710, %v709
    %727 = vmatprep.subr.bf16.mxu0 0
    %728 = vmatpush1.bf16.msra.mxu0 %v718
    %729 = vmatprep.subr.bf16.mxu0 0
    %730 = vmatpush1.bf16.msra.mxu0 %v717
    %731 = vmatprep.subr.bf16.mxu0 0
    %732 = vmatpush1.bf16.msra.mxu0 %v716
    %733 = vmatprep.subr.bf16.mxu0 0
    %734 = vmatpush1.bf16.msra.mxu0 %v715
    %735 = vmatprep.subr.bf16.mxu0 0
    %736 = vmatpush1.bf16.msra.mxu0 %v714
    %737 = vmatprep.subr.bf16.mxu0 0
    %738 = vmatpush1.bf16.msra.mxu0 %v713
    %739 = vmatprep.subr.bf16.mxu0 0
    %740 = vmatpush1.bf16.msra.mxu0 %v712
    %741 = vmatprep.subr.bf16.mxu0 0
    %742 = vmatpush1.bf16.msra.mxu0 %v711
    %743 = vmatprep.subr.bf16.mxu0 0
    %744 = vmatpush2.bf16.msra.mxu0 0
    %745 = vmatprep.subr.bf16.mxu0 0
    %746 = vmatpush2.bf16.msra.mxu0 0
    %747 = vmatprep.subr.bf16.mxu0 0
    %748 = vmatpush2.bf16.msra.mxu0 0
    %749 = vmatprep.subr.bf16.mxu0 0
    %750 = vmatpush2.bf16.msra.mxu0 0
    %751 = vmatprep.subr.bf16.mxu0 0
    %752 = vmatpush2.bf16.msra.mxu0 0
    %753 = vmatprep.subr.bf16.mxu0 0
    %754 = vmatpush2.bf16.msra.mxu0 0
    %755 = vmatprep.subr.bf16.mxu0 0
    %756 = vmatpush2.bf16.msra.mxu0 0
    %757 = vmatprep.subr.bf16.mxu0 0
    %758 = vmatpush2.bf16.msra.mxu0 0
    %759 = vmatprep.mubr.bf16.mxu0 0
    %760 = vmatmul.mubr.bf16.gmra.mxu0 %v662
    %v761 = vpop.f32.mrf.mxu0
    %v762 = vadd.f32 0.0, %v761
    %v763 = vpop.f32.mrf.mxu0
    %v764 = vpop.f32.mrf.mxu0
    %v765 = vadd.f32 0.0, %v764
    %v766 = vpop.f32.mrf.mxu0
    %767 = vdwg.mxu0
    %v768 = vadd.f32 %v660, %v762
    %v769 = vadd.f32 %v661, %v765
    %v770 = vadd.f32 %v768, %v329
    %v771 = vadd.f32 %v769, %v329
    %v772 = vxor.u32 %v770, 2147483648
    %v773 = vxor.u32 %v771, 2147483648
    %v774 = vmul.f32 %v772, 1.442695
    %v775 = vpow.pop %v774
    %v776 = vmul.f32 %v773, 1.442695
    %v777 = vpow.pop %v776
    %v778 = vadd.f32 %v775, 1.0
    %v779 = vadd.f32 %v777, 1.0
    %v780 = vrcp.pop %v778
    %v781 = vmul.f32 1.0, %v780
    %v782 = vrcp.pop %v779
    %v783 = vmul.f32 1.0, %v782
    %784 = vrot.lane.b32.xlu0 %v781, 96
    %v785 = vpop.permute.xlu0 %784
    %786 = vrot.lane.b32.xlu0 %v783, 96
    %v787 = vpop.permute.xlu0 %786
    %788 = vrot.lane.b32.xlu0 %v660, 64
    %v789 = vpop.permute.xlu0 %788
    %790 = vrot.lane.b32.xlu0 %v661, 64
    %v791 = vpop.permute.xlu0 %790
    %792 = vrot.lane.b32.xlu0 %v762, 64
    %v793 = vpop.permute.xlu0 %792
    %794 = vrot.lane.b32.xlu0 %v765, 64
    %v795 = vpop.permute.xlu0 %794
    %v796 = vadd.f32 %v789, %v336
    %v797 = vadd.f32 %v791, %v336
    %v798 = vadd.f32 %v793, %v343
    %v799 = vadd.f32 %v795, %v343
    %v800 = vmul.f32 %v781, %v798
    %v801 = vmul.f32 %v783, %v799
    %v802 = vadd.f32 %v796, %v800
    %v803 = vadd.f32 %v797, %v801
    %v804 = vtanh.pop %v802
    %v805 = vtanh.pop %v803
    %v806 = vsub.f32 1.0, %v785
    %v807 = vsub.f32 1.0, %v787
    %v808 = vmul.f32 %v806, %v804
    %v809 = vmul.f32 %v807, %v805
    %v810 = vmul.f32 %v785, %v655
    %v811 = vmul.f32 %v787, %v656
    %v812 = vadd.f32 %v808, %v810
    %v813 = vadd.f32 %v809, %v811
    %s814 = scalar_lea.vmem [#allocation11], 32
    %815 = vst [vmem:[%s814] sm:$0xff] %v812
    %816 = vst [vmem:[%s814 + $0x8] sm:$0xff] %v813
    %v817 = vld [vmem:[#allocation2 + $0x30] sm:$0xff]
    %v818 = vld [vmem:[#allocation2 + $0x38] sm:$0xff]
    %v819 = vpack.c.bf16 %v813, %v812
    %v820 = vld [vmem:[#allocation9] sm:$0xf]
    %v821 = vld [vmem:[#allocation9 + $0x4] sm:$0xf]
    %v822 = vld [vmem:[#allocation9 + $0x8] sm:$0xf]
    %v823 = vld [vmem:[#allocation9 + $0xc] sm:$0xf]
    %v824 = vld [vmem:[#allocation9 + $0x10] sm:$0xf]
    %v825 = vld [vmem:[#allocation9 + $0x14] sm:$0xf]
    %v826 = vld [vmem:[#allocation9 + $0x18] sm:$0xf]
    %v827 = vld [vmem:[#allocation9 + $0x1c] sm:$0xf]
    %v828 = vld [vmem:[#allocation9 + $0x20] sm:$0xf]
    %v829 = vld [vmem:[#allocation9 + $0x24] sm:$0xf]
    %v830 = vld [vmem:[#allocation9 + $0x28] sm:$0xf]
    %v831 = vld [vmem:[#allocation9 + $0x2c] sm:$0xf]
    %v832 = vld [vmem:[#allocation9 + $0x30] sm:$0xf]
    %v833 = vld [vmem:[#allocation9 + $0x34] sm:$0xf]
    %v834 = vld [vmem:[#allocation9 + $0x38] sm:$0xf]
    %v835 = vld [vmem:[#allocation9 + $0x3c] sm:$0xf]
    %v852 = vunpack.c.l.b16 %v820
    %v853 = vunpack.c.l.b16 %v821
    %v854 = vunpack.c.l.b16 %v822
    %v855 = vunpack.c.l.b16 %v823
    %v856 = vunpack.c.l.b16 %v824
    %v857 = vunpack.c.l.b16 %v825
    %v858 = vunpack.c.l.b16 %v826
    %v859 = vunpack.c.l.b16 %v827
    %v860 = vunpack.c.l.b16 %v828
    %v861 = vunpack.c.l.b16 %v829
    %v862 = vunpack.c.l.b16 %v830
    %v863 = vunpack.c.l.b16 %v831
    %v864 = vunpack.c.l.b16 %v832
    %v865 = vunpack.c.l.b16 %v833
    %v866 = vunpack.c.l.b16 %v834
    %v867 = vunpack.c.l.b16 %v835
    %v868 = vpack.c.b16 %v853, %v852
    %v869 = vpack.c.b16 %v855, %v854
    %v870 = vpack.c.b16 %v857, %v856
    %v871 = vpack.c.b16 %v859, %v858
    %v872 = vpack.c.b16 %v861, %v860
    %v873 = vpack.c.b16 %v863, %v862
    %v874 = vpack.c.b16 %v865, %v864
    %v875 = vpack.c.b16 %v867, %v866
    %884 = vmatprep.subr.bf16.mxu0 0
    %885 = vmatpush1.bf16.msra.mxu0 %v875
    %886 = vmatprep.subr.bf16.mxu0 0
    %887 = vmatpush1.bf16.msra.mxu0 %v874
    %888 = vmatprep.subr.bf16.mxu0 0
    %889 = vmatpush1.bf16.msra.mxu0 %v873
    %890 = vmatprep.subr.bf16.mxu0 0
    %891 = vmatpush1.bf16.msra.mxu0 %v872
    %892 = vmatprep.subr.bf16.mxu0 0
    %893 = vmatpush1.bf16.msra.mxu0 %v871
    %894 = vmatprep.subr.bf16.mxu0 0
    %895 = vmatpush1.bf16.msra.mxu0 %v870
    %896 = vmatprep.subr.bf16.mxu0 0
    %897 = vmatpush1.bf16.msra.mxu0 %v869
    %898 = vmatprep.subr.bf16.mxu0 0
    %899 = vmatpush1.bf16.msra.mxu0 %v868
    %900 = vmatprep.subr.bf16.mxu0 0
    %901 = vmatpush2.bf16.msra.mxu0 0
    %902 = vmatprep.subr.bf16.mxu0 0
    %903 = vmatpush2.bf16.msra.mxu0 0
    %904 = vmatprep.subr.bf16.mxu0 0
    %905 = vmatpush2.bf16.msra.mxu0 0
    %906 = vmatprep.subr.bf16.mxu0 0
    %907 = vmatpush2.bf16.msra.mxu0 0
    %908 = vmatprep.subr.bf16.mxu0 0
    %909 = vmatpush2.bf16.msra.mxu0 0
    %910 = vmatprep.subr.bf16.mxu0 0
    %911 = vmatpush2.bf16.msra.mxu0 0
    %912 = vmatprep.subr.bf16.mxu0 0
    %913 = vmatpush2.bf16.msra.mxu0 0
    %914 = vmatprep.subr.bf16.mxu0 0
    %915 = vmatpush2.bf16.msra.mxu0 0
    %916 = vmatprep.mubr.bf16.mxu0 0
    %917 = vmatmul.mubr.bf16.gmra.mxu0 %v819
    %v918 = vpop.f32.mrf.mxu0
    %v919 = vadd.f32 0.0, %v918
    %v920 = vpop.f32.mrf.mxu0
    %v921 = vpop.f32.mrf.mxu0
    %v922 = vadd.f32 0.0, %v921
    %v923 = vpop.f32.mrf.mxu0
    %924 = vdwg.mxu0
    %v925 = vadd.f32 %v817, %v919
    %v926 = vadd.f32 %v818, %v922
    %v927 = vadd.f32 %v925, %v329
    %v928 = vadd.f32 %v926, %v329
    %v929 = vxor.u32 %v927, 2147483648
    %v930 = vxor.u32 %v928, 2147483648
    %v931 = vmul.f32 %v929, 1.442695
    %v932 = vpow.pop %v931
    %v933 = vmul.f32 %v930, 1.442695
    %v934 = vpow.pop %v933
    %v935 = vadd.f32 %v932, 1.0
    %v936 = vadd.f32 %v934, 1.0
    %v937 = vrcp.pop %v935
    %v938 = vmul.f32 1.0, %v937
    %v939 = vrcp.pop %v936
    %v940 = vmul.f32 1.0, %v939
    %941 = vrot.lane.b32.xlu0 %v938, 96
    %v942 = vpop.permute.xlu0 %941
    %943 = vrot.lane.b32.xlu0 %v940, 96
    %v944 = vpop.permute.xlu0 %943
    %945 = vrot.lane.b32.xlu0 %v817, 64
    %v946 = vpop.permute.xlu0 %945
    %947 = vrot.lane.b32.xlu0 %v818, 64
    %v948 = vpop.permute.xlu0 %947
    %949 = vrot.lane.b32.xlu0 %v919, 64
    %v950 = vpop.permute.xlu0 %949
    %951 = vrot.lane.b32.xlu0 %v922, 64
    %v952 = vpop.permute.xlu0 %951
    %v953 = vadd.f32 %v946, %v336
    %v954 = vadd.f32 %v948, %v336
    %v955 = vadd.f32 %v950, %v343
    %v956 = vadd.f32 %v952, %v343
    %v957 = vmul.f32 %v938, %v955
    %v958 = vmul.f32 %v940, %v956
    %v959 = vadd.f32 %v953, %v957
    %v960 = vadd.f32 %v954, %v958
    %v961 = vtanh.pop %v959
    %v962 = vtanh.pop %v960
    %v963 = vsub.f32 1.0, %v942
    %v964 = vsub.f32 1.0, %v944
    %v965 = vmul.f32 %v963, %v961
    %v966 = vmul.f32 %v964, %v962
    %v967 = vmul.f32 %v942, %v812
    %v968 = vmul.f32 %v944, %v813
    %v969 = vadd.f32 %v965, %v967
    %v970 = vadd.f32 %v966, %v968
    %s971 = scalar_lea.vmem [#allocation11], 48
    %972 = vst [vmem:[%s971] sm:$0xff] %v969
    %973 = vst [vmem:[%s971 + $0x8] sm:$0xff] %v970
    %v974 = vld [vmem:[#allocation2 + $0x40] sm:$0xff]
    %v975 = vld [vmem:[#allocation2 + $0x48] sm:$0xff]
    %v976 = vpack.c.bf16 %v970, %v969
    %v977 = vld [vmem:[#allocation9] sm:$0xf]
    %v978 = vld [vmem:[#allocation9 + $0x4] sm:$0xf]
    %v979 = vld [vmem:[#allocation9 + $0x8] sm:$0xf]
    %v980 = vld [vmem:[#allocation9 + $0xc] sm:$0xf]
    %v981 = vld [vmem:[#allocation9 + $0x10] sm:$0xf]
    %v982 = vld [vmem:[#allocation9 + $0x14] sm:$0xf]
    %v983 = vld [vmem:[#allocation9 + $0x18] sm:$0xf]
    %v984 = vld [vmem:[#allocation9 + $0x1c] sm:$0xf]
    %v985 = vld [vmem:[#allocation9 + $0x20] sm:$0xf]
    %v986 = vld [vmem:[#allocation9 + $0x24] sm:$0xf]
    %v987 = vld [vmem:[#allocation9 + $0x28] sm:$0xf]
    %v988 = vld [vmem:[#allocation9 + $0x2c] sm:$0xf]
    %v989 = vld [vmem:[#allocation9 + $0x30] sm:$0xf]
    %v990 = vld [vmem:[#allocation9 + $0x34] sm:$0xf]
    %v991 = vld [vmem:[#allocation9 + $0x38] sm:$0xf]
    %v992 = vld [vmem:[#allocation9 + $0x3c] sm:$0xf]
    %v1009 = vunpack.c.l.b16 %v977
    %v1010 = vunpack.c.l.b16 %v978
    %v1011 = vunpack.c.l.b16 %v979
    %v1012 = vunpack.c.l.b16 %v980
    %v1013 = vunpack.c.l.b16 %v981
    %v1014 = vunpack.c.l.b16 %v982
    %v1015 = vunpack.c.l.b16 %v983
    %v1016 = vunpack.c.l.b16 %v984
    %v1017 = vunpack.c.l.b16 %v985
    %v1018 = vunpack.c.l.b16 %v986
    %v1019 = vunpack.c.l.b16 %v987
    %v1020 = vunpack.c.l.b16 %v988
    %v1021 = vunpack.c.l.b16 %v989
    %v1022 = vunpack.c.l.b16 %v990
    %v1023 = vunpack.c.l.b16 %v991
    %v1024 = vunpack.c.l.b16 %v992
    %v1025 = vpack.c.b16 %v1010, %v1009
    %v1026 = vpack.c.b16 %v1012, %v1011
    %v1027 = vpack.c.b16 %v1014, %v1013
    %v1028 = vpack.c.b16 %v1016, %v1015
    %v1029 = vpack.c.b16 %v1018, %v1017
    %v1030 = vpack.c.b16 %v1020, %v1019
    %v1031 = vpack.c.b16 %v1022, %v1021
    %v1032 = vpack.c.b16 %v1024, %v1023
    %1041 = vmatprep.subr.bf16.mxu0 0
    %1042 = vmatpush1.bf16.msra.mxu0 %v1032
    %1043 = vmatprep.subr.bf16.mxu0 0
    %1044 = vmatpush1.bf16.msra.mxu0 %v1031
    %1045 = vmatprep.subr.bf16.mxu0 0
    %1046 = vmatpush1.bf16.msra.mxu0 %v1030
    %1047 = vmatprep.subr.bf16.mxu0 0
    %1048 = vmatpush1.bf16.msra.mxu0 %v1029
    %1049 = vmatprep.subr.bf16.mxu0 0
    %1050 = vmatpush1.bf16.msra.mxu0 %v1028
    %1051 = vmatprep.subr.bf16.mxu0 0
    %1052 = vmatpush1.bf16.msra.mxu0 %v1027
    %1053 = vmatprep.subr.bf16.mxu0 0
    %1054 = vmatpush1.bf16.msra.mxu0 %v1026
    %1055 = vmatprep.subr.bf16.mxu0 0
    %1056 = vmatpush1.bf16.msra.mxu0 %v1025
    %1057 = vmatprep.subr.bf16.mxu0 0
    %1058 = vmatpush2.bf16.msra.mxu0 0
    %1059 = vmatprep.subr.bf16.mxu0 0
    %1060 = vmatpush2.bf16.msra.mxu0 0
    %1061 = vmatprep.subr.bf16.mxu0 0
    %1062 = vmatpush2.bf16.msra.mxu0 0
    %1063 = vmatprep.subr.bf16.mxu0 0
    %1064 = vmatpush2.bf16.msra.mxu0 0
    %1065 = vmatprep.subr.bf16.mxu0 0
    %1066 = vmatpush2.bf16.msra.mxu0 0
    %1067 = vmatprep.subr.bf16.mxu0 0
    %1068 = vmatpush2.bf16.msra.mxu0 0
    %1069 = vmatprep.subr.bf16.mxu0 0
    %1070 = vmatpush2.bf16.msra.mxu0 0
    %1071 = vmatprep.subr.bf16.mxu0 0
    %1072 = vmatpush2.bf16.msra.mxu0 0
    %1073 = vmatprep.mubr.bf16.mxu0 0
    %1074 = vmatmul.mubr.bf16.gmra.mxu0 %v976
    %v1075 = vpop.f32.mrf.mxu0
    %v1076 = vadd.f32 0.0, %v1075
    %v1077 = vpop.f32.mrf.mxu0
    %v1078 = vpop.f32.mrf.mxu0
    %v1079 = vadd.f32 0.0, %v1078
    %v1080 = vpop.f32.mrf.mxu0
    %1081 = vdwg.mxu0
    %v1082 = vadd.f32 %v974, %v1076
    %v1083 = vadd.f32 %v975, %v1079
    %v1084 = vadd.f32 %v1082, %v329
    %v1085 = vadd.f32 %v1083, %v329
    %v1086 = vxor.u32 %v1084, 2147483648
    %v1087 = vxor.u32 %v1085, 2147483648
    %v1088 = vmul.f32 %v1086, 1.442695
    %v1089 = vpow.pop %v1088
    %v1090 = vmul.f32 %v1087, 1.442695
    %v1091 = vpow.pop %v1090
    %v1092 = vadd.f32 %v1089, 1.0
    %v1093 = vadd.f32 %v1091, 1.0
    %v1094 = vrcp.pop %v1092
    %v1095 = vmul.f32 1.0, %v1094
    %v1096 = vrcp.pop %v1093
    %v1097 = vmul.f32 1.0, %v1096
    %1098 = vrot.lane.b32.xlu0 %v1095, 96
    %v1099 = vpop.permute.xlu0 %1098
    %1100 = vrot.lane.b32.xlu0 %v1097, 96
    %v1101 = vpop.permute.xlu0 %1100
    %1102 = vrot.lane.b32.xlu0 %v974, 64
    %v1103 = vpop.permute.xlu0 %1102
    %1104 = vrot.lane.b32.xlu0 %v975, 64
    %v1105 = vpop.permute.xlu0 %1104
    %1106 = vrot.lane.b32.xlu0 %v1076, 64
    %v1107 = vpop.permute.xlu0 %1106
    %1108 = vrot.lane.b32.xlu0 %v1079, 64
    %v1109 = vpop.permute.xlu0 %1108
    %v1110 = vadd.f32 %v1103, %v336
    %v1111 = vadd.f32 %v1105, %v336
    %v1112 = vadd.f32 %v1107, %v343
    %v1113 = vadd.f32 %v1109, %v343
    %v1114 = vmul.f32 %v1095, %v1112
    %v1115 = vmul.f32 %v1097, %v1113
    %v1116 = vadd.f32 %v1110, %v1114
    %v1117 = vadd.f32 %v1111, %v1115
    %v1118 = vtanh.pop %v1116
    %v1119 = vtanh.pop %v1117
    %v1120 = vsub.f32 1.0, %v1099
    %v1121 = vsub.f32 1.0, %v1101
    %v1122 = vmul.f32 %v1120, %v1118
    %v1123 = vmul.f32 %v1121, %v1119
    %v1124 = vmul.f32 %v1099, %v969
    %v1125 = vmul.f32 %v1101, %v970
    %v1126 = vadd.f32 %v1122, %v1124
    %v1127 = vadd.f32 %v1123, %v1125
    %s1128 = scalar_lea.vmem [#allocation11], 64
    %1129 = vst [vmem:[%s1128] sm:$0xff] %v1126
    %1130 = vst [vmem:[%s1128 + $0x8] sm:$0xff] %v1127
    %v1131 = vld [vmem:[#allocation2 + $0x50] sm:$0xff]
    %v1132 = vld [vmem:[#allocation2 + $0x58] sm:$0xff]
    %v1133 = vpack.c.bf16 %v1127, %v1126
    %v1134 = vld [vmem:[#allocation9] sm:$0xf]
    %v1135 = vld [vmem:[#allocation9 + $0x4] sm:$0xf]
    %v1136 = vld [vmem:[#allocation9 + $0x8] sm:$0xf]
    %v1137 = vld [vmem:[#allocation9 + $0xc] sm:$0xf]
    %v1138 = vld [vmem:[#allocation9 + $0x10] sm:$0xf]
    %v1139 = vld [vmem:[#allocation9 + $0x14] sm:$0xf]
    %v1140 = vld [vmem:[#allocation9 + $0x18] sm:$0xf]
    %v1141 = vld [vmem:[#allocation9 + $0x1c] sm:$0xf]
    %v1142 = vld [vmem:[#allocation9 + $0x20] sm:$0xf]
    %v1143 = vld [vmem:[#allocation9 + $0x24] sm:$0xf]
    %v1144 = vld [vmem:[#allocation9 + $0x28] sm:$0xf]
    %v1145 = vld [vmem:[#allocation9 + $0x2c] sm:$0xf]
    %v1146 = vld [vmem:[#allocation9 + $0x30] sm:$0xf]
    %v1147 = vld [vmem:[#allocation9 + $0x34] sm:$0xf]
    %v1148 = vld [vmem:[#allocation9 + $0x38] sm:$0xf]
    %v1149 = vld [vmem:[#allocation9 + $0x3c] sm:$0xf]
    %v1166 = vunpack.c.l.b16 %v1134
    %v1167 = vunpack.c.l.b16 %v1135
    %v1168 = vunpack.c.l.b16 %v1136
    %v1169 = vunpack.c.l.b16 %v1137
    %v1170 = vunpack.c.l.b16 %v1138
    %v1171 = vunpack.c.l.b16 %v1139
    %v1172 = vunpack.c.l.b16 %v1140
    %v1173 = vunpack.c.l.b16 %v1141
    %v1174 = vunpack.c.l.b16 %v1142
    %v1175 = vunpack.c.l.b16 %v1143
    %v1176 = vunpack.c.l.b16 %v1144
    %v1177 = vunpack.c.l.b16 %v1145
    %v1178 = vunpack.c.l.b16 %v1146
    %v1179 = vunpack.c.l.b16 %v1147
    %v1180 = vunpack.c.l.b16 %v1148
    %v1181 = vunpack.c.l.b16 %v1149
    %v1182 = vpack.c.b16 %v1167, %v1166
    %v1183 = vpack.c.b16 %v1169, %v1168
    %v1184 = vpack.c.b16 %v1171, %v1170
    %v1185 = vpack.c.b16 %v1173, %v1172
    %v1186 = vpack.c.b16 %v1175, %v1174
    %v1187 = vpack.c.b16 %v1177, %v1176
    %v1188 = vpack.c.b16 %v1179, %v1178
    %v1189 = vpack.c.b16 %v1181, %v1180
    %1198 = vmatprep.subr.bf16.mxu0 0
    %1199 = vmatpush1.bf16.msra.mxu0 %v1189
    %1200 = vmatprep.subr.bf16.mxu0 0
    %1201 = vmatpush1.bf16.msra.mxu0 %v1188
    %1202 = vmatprep.subr.bf16.mxu0 0
    %1203 = vmatpush1.bf16.msra.mxu0 %v1187
    %1204 = vmatprep.subr.bf16.mxu0 0
    %1205 = vmatpush1.bf16.msra.mxu0 %v1186
    %1206 = vmatprep.subr.bf16.mxu0 0
    %1207 = vmatpush1.bf16.msra.mxu0 %v1185
    %1208 = vmatprep.subr.bf16.mxu0 0
    %1209 = vmatpush1.bf16.msra.mxu0 %v1184
    %1210 = vmatprep.subr.bf16.mxu0 0
    %1211 = vmatpush1.bf16.msra.mxu0 %v1183
    %1212 = vmatprep.subr.bf16.mxu0 0
    %1213 = vmatpush1.bf16.msra.mxu0 %v1182
    %1214 = vmatprep.subr.bf16.mxu0 0
    %1215 = vmatpush2.bf16.msra.mxu0 0
    %1216 = vmatprep.subr.bf16.mxu0 0
    %1217 = vmatpush2.bf16.msra.mxu0 0
    %1218 = vmatprep.subr.bf16.mxu0 0
    %1219 = vmatpush2.bf16.msra.mxu0 0
    %1220 = vmatprep.subr.bf16.mxu0 0
    %1221 = vmatpush2.bf16.msra.mxu0 0
    %1222 = vmatprep.subr.bf16.mxu0 0
    %1223 = vmatpush2.bf16.msra.mxu0 0
    %1224 = vmatprep.subr.bf16.mxu0 0
    %1225 = vmatpush2.bf16.msra.mxu0 0
    %1226 = vmatprep.subr.bf16.mxu0 0
    %1227 = vmatpush2.bf16.msra.mxu0 0
    %1228 = vmatprep.subr.bf16.mxu0 0
    %1229 = vmatpush2.bf16.msra.mxu0 0
    %1230 = vmatprep.mubr.bf16.mxu0 0
    %1231 = vmatmul.mubr.bf16.gmra.mxu0 %v1133
    %v1232 = vpop.f32.mrf.mxu0
    %v1233 = vadd.f32 0.0, %v1232
    %v1234 = vpop.f32.mrf.mxu0
    %v1235 = vpop.f32.mrf.mxu0
    %v1236 = vadd.f32 0.0, %v1235
    %v1237 = vpop.f32.mrf.mxu0
    %1238 = vdwg.mxu0
    %v1239 = vadd.f32 %v1131, %v1233
    %v1240 = vadd.f32 %v1132, %v1236
    %v1241 = vadd.f32 %v1239, %v329
    %v1242 = vadd.f32 %v1240, %v329
    %v1243 = vxor.u32 %v1241, 2147483648
    %v1244 = vxor.u32 %v1242, 2147483648
    %v1245 = vmul.f32 %v1243, 1.442695
    %v1246 = vpow.pop %v1245
    %v1247 = vmul.f32 %v1244, 1.442695
    %v1248 = vpow.pop %v1247
    %v1249 = vadd.f32 %v1246, 1.0
    %v1250 = vadd.f32 %v1248, 1.0
    %v1251 = vrcp.pop %v1249
    %v1252 = vmul.f32 1.0, %v1251
    %v1253 = vrcp.pop %v1250
    %v1254 = vmul.f32 1.0, %v1253
    %1255 = vrot.lane.b32.xlu0 %v1252, 96
    %v1256 = vpop.permute.xlu0 %1255
    %1257 = vrot.lane.b32.xlu0 %v1254, 96
    %v1258 = vpop.permute.xlu0 %1257
    %1259 = vrot.lane.b32.xlu0 %v1131, 64
    %v1260 = vpop.permute.xlu0 %1259
    %1261 = vrot.lane.b32.xlu0 %v1132, 64
    %v1262 = vpop.permute.xlu0 %1261
    %1263 = vrot.lane.b32.xlu0 %v1233, 64
    %v1264 = vpop.permute.xlu0 %1263
    %1265 = vrot.lane.b32.xlu0 %v1236, 64
    %v1266 = vpop.permute.xlu0 %1265
    %v1267 = vadd.f32 %v1260, %v336
    %v1268 = vadd.f32 %v1262, %v336
    %v1269 = vadd.f32 %v1264, %v343
    %v1270 = vadd.f32 %v1266, %v343
    %v1271 = vmul.f32 %v1252, %v1269
    %v1272 = vmul.f32 %v1254, %v1270
    %v1273 = vadd.f32 %v1267, %v1271
    %v1274 = vadd.f32 %v1268, %v1272
    %v1275 = vtanh.pop %v1273
    %v1276 = vtanh.pop %v1274
    %v1277 = vsub.f32 1.0, %v1256
    %v1278 = vsub.f32 1.0, %v1258
    %v1279 = vmul.f32 %v1277, %v1275
    %v1280 = vmul.f32 %v1278, %v1276
    %v1281 = vmul.f32 %v1256, %v1126
    %v1282 = vmul.f32 %v1258, %v1127
    %v1283 = vadd.f32 %v1279, %v1281
    %v1284 = vadd.f32 %v1280, %v1282
    %s1285 = scalar_lea.vmem [#allocation11], 80
    %1286 = vst [vmem:[%s1285] sm:$0xff] %v1283
    %1287 = vst [vmem:[%s1285 + $0x8] sm:$0xff] %v1284
    %v1288 = vld [vmem:[#allocation2 + $0x60] sm:$0xff]
    %v1289 = vld [vmem:[#allocation2 + $0x68] sm:$0xff]
    %v1290 = vpack.c.bf16 %v1284, %v1283
    %v1291 = vld [vmem:[#allocation9] sm:$0xf]
    %v1292 = vld [vmem:[#allocation9 + $0x4] sm:$0xf]
    %v1293 = vld [vmem:[#allocation9 + $0x8] sm:$0xf]
    %v1294 = vld [vmem:[#allocation9 + $0xc] sm:$0xf]
    %v1295 = vld [vmem:[#allocation9 + $0x10] sm:$0xf]
    %v1296 = vld [vmem:[#allocation9 + $0x14] sm:$0xf]
    %v1297 = vld [vmem:[#allocation9 + $0x18] sm:$0xf]
    %v1298 = vld [vmem:[#allocation9 + $0x1c] sm:$0xf]
    %v1299 = vld [vmem:[#allocation9 + $0x20] sm:$0xf]
    %v1300 = vld [vmem:[#allocation9 + $0x24] sm:$0xf]
    %v1301 = vld [vmem:[#allocation9 + $0x28] sm:$0xf]
    %v1302 = vld [vmem:[#allocation9 + $0x2c] sm:$0xf]
    %v1303 = vld [vmem:[#allocation9 + $0x30] sm:$0xf]
    %v1304 = vld [vmem:[#allocation9 + $0x34] sm:$0xf]
    %v1305 = vld [vmem:[#allocation9 + $0x38] sm:$0xf]
    %v1306 = vld [vmem:[#allocation9 + $0x3c] sm:$0xf]
    %v1323 = vunpack.c.l.b16 %v1291
    %v1324 = vunpack.c.l.b16 %v1292
    %v1325 = vunpack.c.l.b16 %v1293
    %v1326 = vunpack.c.l.b16 %v1294
    %v1327 = vunpack.c.l.b16 %v1295
    %v1328 = vunpack.c.l.b16 %v1296
    %v1329 = vunpack.c.l.b16 %v1297
    %v1330 = vunpack.c.l.b16 %v1298
    %v1331 = vunpack.c.l.b16 %v1299
    %v1332 = vunpack.c.l.b16 %v1300
    %v1333 = vunpack.c.l.b16 %v1301
    %v1334 = vunpack.c.l.b16 %v1302
    %v1335 = vunpack.c.l.b16 %v1303
    %v1336 = vunpack.c.l.b16 %v1304
    %v1337 = vunpack.c.l.b16 %v1305
    %v1338 = vunpack.c.l.b16 %v1306
    %v1339 = vpack.c.b16 %v1324, %v1323
    %v1340 = vpack.c.b16 %v1326, %v1325
    %v1341 = vpack.c.b16 %v1328, %v1327
    %v1342 = vpack.c.b16 %v1330, %v1329
    %v1343 = vpack.c.b16 %v1332, %v1331
    %v1344 = vpack.c.b16 %v1334, %v1333
    %v1345 = vpack.c.b16 %v1336, %v1335
    %v1346 = vpack.c.b16 %v1338, %v1337
    %1355 = vmatprep.subr.bf16.mxu0 0
    %1356 = vmatpush1.bf16.msra.mxu0 %v1346
    %1357 = vmatprep.subr.bf16.mxu0 0
    %1358 = vmatpush1.bf16.msra.mxu0 %v1345
    %1359 = vmatprep.subr.bf16.mxu0 0
    %1360 = vmatpush1.bf16.msra.mxu0 %v1344
    %1361 = vmatprep.subr.bf16.mxu0 0
    %1362 = vmatpush1.bf16.msra.mxu0 %v1343
    %1363 = vmatprep.subr.bf16.mxu0 0
    %1364 = vmatpush1.bf16.msra.mxu0 %v1342
    %1365 = vmatprep.subr.bf16.mxu0 0
    %1366 = vmatpush1.bf16.msra.mxu0 %v1341
    %1367 = vmatprep.subr.bf16.mxu0 0
    %1368 = vmatpush1.bf16.msra.mxu0 %v1340
    %1369 = vmatprep.subr.bf16.mxu0 0
    %1370 = vmatpush1.bf16.msra.mxu0 %v1339
    %1371 = vmatprep.subr.bf16.mxu0 0
    %1372 = vmatpush2.bf16.msra.mxu0 0
    %1373 = vmatprep.subr.bf16.mxu0 0
    %1374 = vmatpush2.bf16.msra.mxu0 0
    %1375 = vmatprep.subr.bf16.mxu0 0
    %1376 = vmatpush2.bf16.msra.mxu0 0
    %1377 = vmatprep.subr.bf16.mxu0 0
    %1378 = vmatpush2.bf16.msra.mxu0 0
    %1379 = vmatprep.subr.bf16.mxu0 0
    %1380 = vmatpush2.bf16.msra.mxu0 0
    %1381 = vmatprep.subr.bf16.mxu0 0
    %1382 = vmatpush2.bf16.msra.mxu0 0
    %1383 = vmatprep.subr.bf16.mxu0 0
    %1384 = vmatpush2.bf16.msra.mxu0 0
    %1385 = vmatprep.subr.bf16.mxu0 0
    %1386 = vmatpush2.bf16.msra.mxu0 0
    %1387 = vmatprep.mubr.bf16.mxu0 0
    %1388 = vmatmul.mubr.bf16.gmra.mxu0 %v1290
    %v1389 = vpop.f32.mrf.mxu0
    %v1390 = vadd.f32 0.0, %v1389
    %v1391 = vpop.f32.mrf.mxu0
    %v1392 = vpop.f32.mrf.mxu0
    %v1393 = vadd.f32 0.0, %v1392
    %v1394 = vpop.f32.mrf.mxu0
    %1395 = vdwg.mxu0
    %v1396 = vadd.f32 %v1288, %v1390
    %v1397 = vadd.f32 %v1289, %v1393
    %v1398 = vadd.f32 %v1396, %v329
    %v1399 = vadd.f32 %v1397, %v329
    %v1400 = vxor.u32 %v1398, 2147483648
    %v1401 = vxor.u32 %v1399, 2147483648
    %v1402 = vmul.f32 %v1400, 1.442695
    %v1403 = vpow.pop %v1402
    %v1404 = vmul.f32 %v1401, 1.442695
    %v1405 = vpow.pop %v1404
    %v1406 = vadd.f32 %v1403, 1.0
    %v1407 = vadd.f32 %v1405, 1.0
    %v1408 = vrcp.pop %v1406
    %v1409 = vmul.f32 1.0, %v1408
    %v1410 = vrcp.pop %v1407
    %v1411 = vmul.f32 1.0, %v1410
    %1412 = vrot.lane.b32.xlu0 %v1409, 96
    %v1413 = vpop.permute.xlu0 %1412
    %1414 = vrot.lane.b32.xlu0 %v1411, 96
    %v1415 = vpop.permute.xlu0 %1414
    %1416 = vrot.lane.b32.xlu0 %v1288, 64
    %v1417 = vpop.permute.xlu0 %1416
    %1418 = vrot.lane.b32.xlu0 %v1289, 64
    %v1419 = vpop.permute.xlu0 %1418
    %1420 = vrot.lane.b32.xlu0 %v1390, 64
    %v1421 = vpop.permute.xlu0 %1420
    %1422 = vrot.lane.b32.xlu0 %v1393, 64
    %v1423 = vpop.permute.xlu0 %1422
    %v1424 = vadd.f32 %v1417, %v336
    %v1425 = vadd.f32 %v1419, %v336
    %v1426 = vadd.f32 %v1421, %v343
    %v1427 = vadd.f32 %v1423, %v343
    %v1428 = vmul.f32 %v1409, %v1426
    %v1429 = vmul.f32 %v1411, %v1427
    %v1430 = vadd.f32 %v1424, %v1428
    %v1431 = vadd.f32 %v1425, %v1429
    %v1432 = vtanh.pop %v1430
    %v1433 = vtanh.pop %v1431
    %v1434 = vsub.f32 1.0, %v1413
    %v1435 = vsub.f32 1.0, %v1415
    %v1436 = vmul.f32 %v1434, %v1432
    %v1437 = vmul.f32 %v1435, %v1433
    %v1438 = vmul.f32 %v1413, %v1283
    %v1439 = vmul.f32 %v1415, %v1284
    %v1440 = vadd.f32 %v1436, %v1438
    %v1441 = vadd.f32 %v1437, %v1439
    %s1442 = scalar_lea.vmem [#allocation11], 96
    %1443 = vst [vmem:[%s1442] sm:$0xff] %v1440
    %1444 = vst [vmem:[%s1442 + $0x8] sm:$0xff] %v1441
    %v1445 = vld [vmem:[#allocation2 + $0x70] sm:$0xff]
    %v1446 = vld [vmem:[#allocation2 + $0x78] sm:$0xff]
    %v1447 = vpack.c.bf16 %v1441, %v1440
    %v1448 = vld [vmem:[#allocation9] sm:$0xf]
    %v1449 = vld [vmem:[#allocation9 + $0x4] sm:$0xf]
    %v1450 = vld [vmem:[#allocation9 + $0x8] sm:$0xf]
    %v1451 = vld [vmem:[#allocation9 + $0xc] sm:$0xf]
    %v1452 = vld [vmem:[#allocation9 + $0x10] sm:$0xf]
    %v1453 = vld [vmem:[#allocation9 + $0x14] sm:$0xf]
    %v1454 = vld [vmem:[#allocation9 + $0x18] sm:$0xf]
    %v1455 = vld [vmem:[#allocation9 + $0x1c] sm:$0xf]
    %v1456 = vld [vmem:[#allocation9 + $0x20] sm:$0xf]
    %v1457 = vld [vmem:[#allocation9 + $0x24] sm:$0xf]
    %v1458 = vld [vmem:[#allocation9 + $0x28] sm:$0xf]
    %v1459 = vld [vmem:[#allocation9 + $0x2c] sm:$0xf]
    %v1460 = vld [vmem:[#allocation9 + $0x30] sm:$0xf]
    %v1461 = vld [vmem:[#allocation9 + $0x34] sm:$0xf]
    %v1462 = vld [vmem:[#allocation9 + $0x38] sm:$0xf]
    %v1463 = vld [vmem:[#allocation9 + $0x3c] sm:$0xf]
    %v1480 = vunpack.c.l.b16 %v1448
    %v1481 = vunpack.c.l.b16 %v1449
    %v1482 = vunpack.c.l.b16 %v1450
    %v1483 = vunpack.c.l.b16 %v1451
    %v1484 = vunpack.c.l.b16 %v1452
    %v1485 = vunpack.c.l.b16 %v1453
    %v1486 = vunpack.c.l.b16 %v1454
    %v1487 = vunpack.c.l.b16 %v1455
    %v1488 = vunpack.c.l.b16 %v1456
    %v1489 = vunpack.c.l.b16 %v1457
    %v1490 = vunpack.c.l.b16 %v1458
    %v1491 = vunpack.c.l.b16 %v1459
    %v1492 = vunpack.c.l.b16 %v1460
    %v1493 = vunpack.c.l.b16 %v1461
    %v1494 = vunpack.c.l.b16 %v1462
    %v1495 = vunpack.c.l.b16 %v1463
    %v1496 = vpack.c.b16 %v1481, %v1480
    %v1497 = vpack.c.b16 %v1483, %v1482
    %v1498 = vpack.c.b16 %v1485, %v1484
    %v1499 = vpack.c.b16 %v1487, %v1486
    %v1500 = vpack.c.b16 %v1489, %v1488
    %v1501 = vpack.c.b16 %v1491, %v1490
    %v1502 = vpack.c.b16 %v1493, %v1492
    %v1503 = vpack.c.b16 %v1495, %v1494
    %1512 = vmatprep.subr.bf16.mxu0 0
    %1513 = vmatpush1.bf16.msra.mxu0 %v1503
    %1514 = vmatprep.subr.bf16.mxu0 0
    %1515 = vmatpush1.bf16.msra.mxu0 %v1502
    %1516 = vmatprep.subr.bf16.mxu0 0
    %1517 = vmatpush1.bf16.msra.mxu0 %v1501
    %1518 = vmatprep.subr.bf16.mxu0 0
    %1519 = vmatpush1.bf16.msra.mxu0 %v1500
    %1520 = vmatprep.subr.bf16.mxu0 0
    %1521 = vmatpush1.bf16.msra.mxu0 %v1499
    %1522 = vmatprep.subr.bf16.mxu0 0
    %1523 = vmatpush1.bf16.msra.mxu0 %v1498
    %1524 = vmatprep.subr.bf16.mxu0 0
    %1525 = vmatpush1.bf16.msra.mxu0 %v1497
    %1526 = vmatprep.subr.bf16.mxu0 0
    %1527 = vmatpush1.bf16.msra.mxu0 %v1496
    %1528 = vmatprep.subr.bf16.mxu0 0
    %1529 = vmatpush2.bf16.msra.mxu0 0
    %1530 = vmatprep.subr.bf16.mxu0 0
    %1531 = vmatpush2.bf16.msra.mxu0 0
    %1532 = vmatprep.subr.bf16.mxu0 0
    %1533 = vmatpush2.bf16.msra.mxu0 0
    %1534 = vmatprep.subr.bf16.mxu0 0
    %1535 = vmatpush2.bf16.msra.mxu0 0
    %1536 = vmatprep.subr.bf16.mxu0 0
    %1537 = vmatpush2.bf16.msra.mxu0 0
    %1538 = vmatprep.subr.bf16.mxu0 0
    %1539 = vmatpush2.bf16.msra.mxu0 0
    %1540 = vmatprep.subr.bf16.mxu0 0
    %1541 = vmatpush2.bf16.msra.mxu0 0
    %1542 = vmatprep.subr.bf16.mxu0 0
    %1543 = vmatpush2.bf16.msra.mxu0 0
    %1544 = vmatprep.mubr.bf16.mxu0 0
    %1545 = vmatmul.mubr.bf16.gmra.mxu0 %v1447
    %v1546 = vpop.f32.mrf.mxu0
    %v1547 = vadd.f32 0.0, %v1546
    %v1548 = vpop.f32.mrf.mxu0
    %v1549 = vpop.f32.mrf.mxu0
    %v1550 = vadd.f32 0.0, %v1549
    %v1551 = vpop.f32.mrf.mxu0
    %1552 = vdwg.mxu0
    %v1553 = vadd.f32 %v1445, %v1547
    %v1554 = vadd.f32 %v1446, %v1550
    %v1555 = vadd.f32 %v1553, %v329
    %v1556 = vadd.f32 %v1554, %v329
    %v1557 = vxor.u32 %v1555, 2147483648
    %v1558 = vxor.u32 %v1556, 2147483648
    %v1559 = vmul.f32 %v1557, 1.442695
    %v1560 = vpow.pop %v1559
    %v1561 = vmul.f32 %v1558, 1.442695
    %v1562 = vpow.pop %v1561
    %v1563 = vadd.f32 %v1560, 1.0
    %v1564 = vadd.f32 %v1562, 1.0
    %v1565 = vrcp.pop %v1563
    %v1566 = vmul.f32 1.0, %v1565
    %v1567 = vrcp.pop %v1564
    %v1568 = vmul.f32 1.0, %v1567
    %1569 = vrot.lane.b32.xlu0 %v1566, 96
    %v1570 = vpop.permute.xlu0 %1569
    %1571 = vrot.lane.b32.xlu0 %v1568, 96
    %v1572 = vpop.permute.xlu0 %1571
    %1573 = vrot.lane.b32.xlu0 %v1445, 64
    %v1574 = vpop.permute.xlu0 %1573
    %1575 = vrot.lane.b32.xlu0 %v1446, 64
    %v1576 = vpop.permute.xlu0 %1575
    %1577 = vrot.lane.b32.xlu0 %v1547, 64
    %v1578 = vpop.permute.xlu0 %1577
    %1579 = vrot.lane.b32.xlu0 %v1550, 64
    %v1580 = vpop.permute.xlu0 %1579
    %v1581 = vadd.f32 %v1574, %v336
    %v1582 = vadd.f32 %v1576, %v336
    %v1583 = vadd.f32 %v1578, %v343
    %v1584 = vadd.f32 %v1580, %v343
    %v1585 = vmul.f32 %v1566, %v1583
    %v1586 = vmul.f32 %v1568, %v1584
    %v1587 = vadd.f32 %v1581, %v1585
    %v1588 = vadd.f32 %v1582, %v1586
    %v1589 = vtanh.pop %v1587
    %v1590 = vtanh.pop %v1588
    %v1591 = vsub.f32 1.0, %v1570
    %v1592 = vsub.f32 1.0, %v1572
    %v1593 = vmul.f32 %v1591, %v1589
    %v1594 = vmul.f32 %v1592, %v1590
    %v1595 = vmul.f32 %v1570, %v1440
    %v1596 = vmul.f32 %v1572, %v1441
    %v1597 = vadd.f32 %v1593, %v1595
    %v1598 = vadd.f32 %v1594, %v1596
    %s1599 = scalar_lea.vmem [#allocation11], 112
    %1600 = vst [vmem:[%s1599] sm:$0xff] %v1597
    %1601 = vst [vmem:[%s1599 + $0x8] sm:$0xff] %v1598
    // Predicated region
    $region46: #{tpu_custom_call.1} parent=1 // pred_check
      _
    $region47: #{tpu_custom_call.1} parent=1 // pred_check_branch
      %1603 = sbr.rel (0) target = $region49
    $region48: #{tpu_custom_call.1} parent=1 // pred_region
      %s1605 = ssub.s32 2048, 2048
      %1606 = vsyncadd [#allocation5], %s1605
      %s1607 = sshll.u32 [#allocation11], 4
      %s1608 = int_to_ptr.vmem [resolvable:$true] %s1607
      %1613 = dma.vmem_to_hbm [thread:$0]  %s1608, 2048, %s7, [#allocation5], 128, 128, 8
    $region49: #{tpu_custom_call.1} parent=1 // pred_fallthru
      _
    // Predicated region
    $region50: #{tpu_custom_call.1} parent=1 // pred_check
      _
    $region51: #{tpu_custom_call.1} parent=1 // pred_check_branch
      %1615 = sbr.rel (0) target = $region53
    $region52: #{tpu_custom_call.1} parent=1 // pred_region
      %1616 = dma.done [#allocation5], 2048
    $region53: #{tpu_custom_call.1} parent=1 // pred_fallthru
      _
    %1617 = vsyncpa [#allocation4], 1
    %1618 = vsyncpa [#allocation7], 1
    %1619 = vsyncpa [#allocation10], 1
    %1620 = vsyncpa [#allocation5], 1

</llo_original>
